<compile_context>
chip_gen: v7x
topology: tpu7x:2x2x1
jax: 0.10.0
libtpu: 0.0.40
codegen_flags: <defaults>
</compile_context>

<pallas_src>
import jax
import jax.numpy as jnp
from jax.experimental import pallas as pl
from jax.experimental.pallas import tpu as pltpu


def _round_up(n, m):
    return ((n + m - 1) // m) * m


# -----------------------------------------------------------------------------
# Pallas kernel: one (batch-block, time-chunk) of the GRU recurrence.
# -----------------------------------------------------------------------------
def _gru_kernel(x_ref, h0_ref, wx_ref, bx_ref, wh_ref, bnh_ref, h_out_ref,
                h_carry, xp_scr):
    # x_ref  : (Tc, Bc, Finp) f32     wx_ref : (Finp, 3*Fhp) bf16    bx_ref : (1, 3*Fhp) f32
    # h0_ref : (Bc, Fhp)      f32     wh_ref : (Fhp,  3*Fhp) bf16    bnh_ref: (1, Fhp)    f32
    # h_out_ref: (Tc, Bc, Fhp) f32    h_carry: (Bc, Fhp) f32 VMEM    xp_scr : (Tc, Bc, 3*Fhp) f32 VMEM
    Tc, Bc, Fhp = h_out_ref.shape
    Finp = x_ref.shape[-1]

    # Start of a new batch block's time sweep: (re)load the initial hidden state.
    @pl.when(pl.program_id(1) == 0)
    def _():
        h_carry[...] = h0_ref[...]

    # Chunk prologue: x-side gate projections for all Tc steps in ONE fused MXU matmul
    # (bf16 operands, f32 accumulate).  Paired r/z biases are pre-folded into bx and
    # added once per chunk.  The reshapes only split/merge full (8,128) f32 tiles.
    x2 = x_ref[...].reshape(Tc * Bc, Finp)
    xp = jnp.dot(x2.astype(wx_ref.dtype), wx_ref[...],
                 preferred_element_type=jnp.float32)
    xp_scr[...] = (xp + bx_ref[...]).reshape(Tc, Bc, 3 * Fhp)

    # Candidate-gate hidden bias: broadcast once per chunk, not per (unrolled) step.
    bnh = jnp.broadcast_to(bnh_ref[...], (Bc, Fhp))

    def step(t, h):
        gx = xp_scr[t]                                   # leading-axis index: no relayout
        gh = jnp.dot(h.astype(wh_ref.dtype), wh_ref[...],
                     preferred_element_type=jnp.float32)
        # Gate blocks are 128-lane aligned (Fhp is a multiple of 128) -> whole-tile slices.
        r = jax.nn.sigmoid(gx[:, :Fhp] + gh[:, :Fhp])
        z = jax.nn.sigmoid(gx[:, Fhp:2 * Fhp] + gh[:, Fhp:2 * Fhp])
        n = jnp.tanh(gx[:, 2 * Fhp:] + r * (gh[:, 2 * Fhp:] + bnh))
        h_new = (1.0 - z) * n + z * h
        h_out_ref[t] = h_new                             # lane-dense, unmasked store
        return h_new

    # Serial recurrence over the chunk; capped unroll (the carried h already serializes).
    h_carry[...] = jax.lax.fori_loop(0, Tc, step, h_carry[...], unroll=4)


# -----------------------------------------------------------------------------
# Parameter packing / padding (glue).
# -----------------------------------------------------------------------------
def _pad2(a, rows, cols):
    return jnp.pad(a, ((0, rows - a.shape[0]), (0, cols - a.shape[1])))


def _pack_gru_params(params, Finp, Fhp, mxu_dtype):
    """params: [(W, b)] x 6 ordered [r_x, r_h, z_x, z_h, n_x, n_h]; W is (f_in, Fh), b is (1, Fh).
    Each gate block is zero-padded to a 128-lane multiple so gate slices stay tile-aligned."""
    (wrx, brx), (wrh, brh), (wzx, bzx), (wzh, bzh), (wnx, bnx), (wnh, bnh) = params
    wx = jnp.concatenate([_pad2(wrx, Finp, Fhp), _pad2(wzx, Finp, Fhp),
                          _pad2(wnx, Finp, Fhp)], axis=1)               # (Finp, 3*Fhp)
    wh = jnp.concatenate([_pad2(wrh, Fhp, Fhp), _pad2(wzh, Fhp, Fhp),
                          _pad2(wnh, Fhp, Fhp)], axis=1)                # (Fhp,  3*Fhp)
    # r/z biases fold pairwise onto the x side; bnh must stay inside r * (Wnh h + bnh).
    bx = jnp.concatenate([_pad2(brx + brh, 1, Fhp), _pad2(bzx + bzh, 1, Fhp),
                          _pad2(bnx, 1, Fhp)], axis=1)                  # (1, 3*Fhp)
    bnh_p = _pad2(bnh, 1, Fhp)                                          # (1, Fhp)
    return (wx.astype(mxu_dtype), bx.astype(jnp.float32),
            wh.astype(mxu_dtype), bnh_p.astype(jnp.float32))


def _vmem_footprint_bytes(block_t, block_b, Finp, Fhp, mxu_dtype):
    isz = jnp.dtype(mxu_dtype).itemsize
    x_blk = block_t * block_b * Finp * 4 * 2          # double-buffered x block (f32)
    out_blk = block_t * block_b * Fhp * 4 * 2         # double-buffered output block
    weights = (Finp * 3 * Fhp + Fhp * 3 * Fhp) * isz * 2
    biases = (3 * Fhp + Fhp) * 4 * 2
    scratch = block_b * Fhp * 4 + block_t * block_b * 3 * Fhp * 4
    return x_blk + out_blk + weights + biases + scratch


# -----------------------------------------------------------------------------
# Wrapper: pad to (8, 128) tiles, pack weights, call the chunked kernel.
# -----------------------------------------------------------------------------
def equivariant_gru_pallas(x_flat, h0_flat, params, *, block_t=4, block_b=None,
                           mxu_dtype=jnp.bfloat16):
    """x_flat: (T, B, Fin) f32; h0_flat: (B, Fh) f32. Returns h_all: (T, B, Fh) f32."""
    T, B, Fin = x_flat.shape
    Fh = h0_flat.shape[-1]

    Bp = _round_up(B, 8)
    Finp = _round_up(Fin, 128)
    Fhp = _round_up(Fh, 128)
    Tp = _round_up(T, block_t)
    if block_b is None:
        block_b = Bp            # on v7x set block_b = Bp // 2 to split batch over the 2 TCs
    assert Bp % block_b == 0 and block_b % 8 == 0
    n_b, n_t = Bp // block_b, Tp // block_t

    # Surface the scoped-VMEM limit explicitly instead of relying on the default.
    fp = _vmem_footprint_bytes(block_t, block_b, Finp, Fhp, mxu_dtype)
    assert fp < 28 * 1024 * 1024, (
        f"per-chunk VMEM footprint {fp / 2**20:.1f} MiB would exceed the 32 MiB scoped "
        f"default (v7x physical VMEM is 64 MiB); reduce block_t and/or block_b.")

    wx, bx, wh, bnh = _pack_gru_params(params, Finp, Fhp, mxu_dtype)

    # x stays f32 in HBM so the in-kernel (Tc,Bc,Finp)->(Tc*Bc,Finp) merge is a free,
    # tile-aligned relabel; it is cast to bf16 adjacent to the MXU dot.
    xpad = jnp.zeros((Tp, Bp, Finp), jnp.float32).at[:T, :B, :Fin].set(x_flat)
    h0p = jnp.zeros((Bp, Fhp), jnp.float32).at[:B, :Fh].set(h0_flat)

    out = pl.pallas_call(
        _gru_kernel,
        out_shape=jax.ShapeDtypeStruct((Tp, Bp, Fhp), jnp.float32),
        grid_spec=pltpu.PrefetchScalarGridSpec(
            num_scalar_prefetch=0,
            grid=(n_b, n_t),
            in_specs=[
                pl.BlockSpec((block_t, block_b, Finp), lambda b, t: (t, b, 0)),  # x
                pl.BlockSpec((block_b, Fhp),           lambda b, t: (b, 0)),     # h0
                pl.BlockSpec((Finp, 3 * Fhp),          lambda b, t: (0, 0)),     # wx
                pl.BlockSpec((1, 3 * Fhp),             lambda b, t: (0, 0)),     # bx
                pl.BlockSpec((Fhp, 3 * Fhp),           lambda b, t: (0, 0)),     # wh
                pl.BlockSpec((1, Fhp),                 lambda b, t: (0, 0)),     # bnh
            ],
            out_specs=pl.BlockSpec((block_t, block_b, Fhp), lambda b, t: (t, b, 0)),
            scratch_shapes=[
                pltpu.VMEM((block_b, Fhp), jnp.float32),                 # carried hidden state
                pltpu.VMEM((block_t, block_b, 3 * Fhp), jnp.float32),    # per-chunk x projections
            ],
        ),
        compiler_params=pltpu.CompilerParams(
            dimension_semantics=("parallel", "arbitrary")),
    )(xpad, h0p, wx, bx, wh, bnh)

    return out[:T, :B, :Fh]


# -----------------------------------------------------------------------------
# Plain-JAX reference (mirrors the PyTorch module exactly).
# -----------------------------------------------------------------------------
def equivariant_gru_ref(x_flat, h0_flat, params, mxu_dtype=None):
    """mxu_dtype=None -> pure f32; mxu_dtype=bf16 -> emulate the kernel's MXU operand dtype
    (f32 accumulation / f32 gate math, identical module semantics)."""
    (wrx, brx), (wrh, brh), (wzx, bzx), (wzh, bzh), (wnx, bnx), (wnh, bnh) = params

    def mx(a, w):
        if mxu_dtype is not None:
            return jnp.dot(a.astype(mxu_dtype), w.astype(mxu_dtype),
                           preferred_element_type=jnp.float32)
        return jnp.dot(a, w, preferred_element_type=jnp.float32)

    def step(h, x):
        r = jax.nn.sigmoid(mx(x, wrx) + brx + mx(h, wrh) + brh)
        z = jax.nn.sigmoid(mx(h, wzh) + bzh + mx(x, wzx) + bzx)
        n = jnp.tanh(mx(x, wnx) + bnx + r * (mx(h, wnh) + bnh))
        h_new = (1.0 - z) * n + z * h
        return h_new, h_new

    h_t, h_all = jax.lax.scan(step, h0_flat, x_flat)
    return h_all, h_t


# -----------------------------------------------------------------------------
# Deterministic equivariant parameter construction (glue, plain JAX).
# -----------------------------------------------------------------------------
def _reversal_rep(channels, repr_size):
    """Block-diagonal permutation: reverse the representation axis per channel."""
    p = jnp.eye(repr_size, dtype=jnp.float32)[::-1]
    return jnp.kron(jnp.eye(channels, dtype=jnp.float32), p)


def _make_basis_linear(key, f_in, f_out, p_in, p_out):
    """Dense weights projected onto the equivariant subspace via the Reynolds operator
    of the 2-element reflection group {e, g}."""
    # TODO(synk): general symmetrizer.groups.Group basis enumeration is weight
    # construction (not forward compute); only the reflection group is built here.
    kw, kb = jax.random.split(key)
    w = jax.random.normal(kw, (f_out, f_in), jnp.float32) / jnp.sqrt(jnp.float32(f_in))
    b = 0.1 * jax.random.normal(kb, (f_out,), jnp.float32)
    w_eq = 0.5 * (w + p_out @ w @ p_in.T)
    b_eq = 0.5 * (b + p_out @ b)
    # kernel consumes W transposed: (f_in, f_out), bias as (1, f_out)
    return w_eq.T, b_eq.reshape(1, f_out)


if __name__ == "__main__":
    # Small shapes consistent with the module:
    #   seq T=8, batch B=2, channels_in=2, input_dim=4, channels_out=3, output_dim=4
    T, B = 8, 2
    Cin, Din = 2, 4
    Cout, Dout = 3, 4
    Fin, Fh = Cin * Din, Cout * Dout

    key = jax.random.PRNGKey(0)
    x = jax.random.normal(key, (T, B, Cin, Din), jnp.float32)
    h0 = jnp.zeros((B, Cout, Dout), jnp.float32)   # module default h0 = zeros

    # Group representations (reflection within each channel's representation).
    p_in = _reversal_rep(Cin, Din)     # acts on flattened x features
    p_hid = _reversal_rep(Cout, Dout)  # acts on flattened h features

    wkeys = jax.random.split(jax.random.PRNGKey(1), 6)
    params = [
        _make_basis_linear(wkeys[0], Fin, Fh, p_in, p_hid),   # reset_gate_x
        _make_basis_linear(wkeys[1], Fh, Fh, p_hid, p_hid),   # reset_gate_h
        _make_basis_linear(wkeys[2], Fin, Fh, p_in, p_hid),   # update_gate_x
        _make_basis_linear(wkeys[3], Fh, Fh, p_hid, p_hid),   # update_gate_h
        _make_basis_linear(wkeys[4], Fin, Fh, p_in, p_hid),   # candidate_gate_x
        _make_basis_linear(wkeys[5], Fh, Fh, p_hid, p_hid),   # candidate_gate_h
    ]

    x_flat = x.reshape(T, B, Fin)
    h0_flat = h0.reshape(B, Fh)

    # Pallas kernel run (time-major, batch_first=False semantics).
    h_all_flat = jax.block_until_ready(
        equivariant_gru_pallas(x_flat, h0_flat, params, block_t=4))
    h_all = h_all_flat.reshape(T, B, Cout, Dout)   # == PyTorch output `h`
    h_t = h_all[-1]                                # == PyTorch output `h_t`

    # Tight correctness check vs. a reference using the same bf16 MXU operand dtype.
    h_ref_emul, _ = equivariant_gru_ref(x_flat, h0_flat, params, mxu_dtype=jnp.bfloat16)
    assert jnp.allclose(h_all_flat, h_ref_emul, rtol=2e-3, atol=2e-3)

    # Sanity check vs. the pure-f32 module mirror (bf16 MXU rounding is the only diff).
    h_ref_f32, h_t_ref = equivariant_gru_ref(x_flat, h0_flat, params)
    assert jnp.allclose(h_all_flat, h_ref_f32, rtol=5e-2, atol=5e-2)
    assert jnp.allclose(h_t.reshape(B, Fh), h_ref_f32[-1], rtol=5e-2, atol=5e-2)

    print("KERNEL_OK")
</pallas_src>

<mosaic_0001>
module attributes {stable_mosaic.version = 11 : i64} {
  func.func @_gru_kernel(%arg0: i32, %arg1: i32, %arg2: memref<4x8x128xf32, #tpu.memory_space<vmem>>, %arg3: memref<8x128xf32, #tpu.memory_space<vmem>>, %arg4: memref<128x384xbf16, #tpu.memory_space<vmem>>, %arg5: memref<1x384xf32, #tpu.memory_space<vmem>>, %arg6: memref<128x384xbf16, #tpu.memory_space<vmem>>, %arg7: memref<1x128xf32, #tpu.memory_space<vmem>>, %arg8: memref<4x8x128xf32, #tpu.memory_space<vmem>>, %arg9: memref<8x128xf32, #tpu.memory_space<vmem>>, %arg10: memref<4x8x384xf32, #tpu.memory_space<vmem>>) attributes {dimension_semantics = [#tpu.dimension_semantics<parallel>, #tpu.dimension_semantics<arbitrary>], iteration_bounds = array<i64: 1, 2>, scalar_prefetch = 0 : i64, scratch_operands = 2 : i64, tpu.core_type = #tpu.core_type<tc>, window_params = [{transform_indices = @transform_0, window_bounds = array<i64: 4, 8, 128>}, {transform_indices = @transform_1, window_bounds = array<i64: 8, 128>}, {pipeline_mode = #tpu.pipeline_mode<synchronous>, transform_indices = @transform_2, window_bounds = array<i64: 128, 384>}, {pipeline_mode = #tpu.pipeline_mode<synchronous>, transform_indices = @transform_3, window_bounds = array<i64: 1, 384>}, {pipeline_mode = #tpu.pipeline_mode<synchronous>, transform_indices = @transform_4, window_bounds = array<i64: 128, 384>}, {pipeline_mode = #tpu.pipeline_mode<synchronous>, transform_indices = @transform_5, window_bounds = array<i64: 1, 128>}, {transform_indices = @transform_6, window_bounds = array<i64: 4, 8, 128>}]} {
    %c0_i32 = arith.constant 0 : i32
    %0 = arith.cmpi eq, %arg1, %c0_i32 : i32
    %1 = arith.extui %0 : i1 to i32
    %c0_i32_0 = arith.constant 0 : i32
    %2 = arith.cmpi ne, %1, %c0_i32_0 : i32
    scf.if %2 {
      %c0_57 = arith.constant 0 : index
      %c0_58 = arith.constant 0 : index
      %166 = vector.load %arg3[%c0_57, %c0_58] : memref<8x128xf32, #tpu.memory_space<vmem>>, vector<8x128xf32>
      %c0_59 = arith.constant 0 : index
      %c0_60 = arith.constant 0 : index
      %167 = vector.load %arg9[%c0_59, %c0_60] : memref<8x128xf32, #tpu.memory_space<vmem>>, vector<8x128xf32>
      tpu.vector_store %arg9[%c0_59, %c0_60], %166 {strides = array<i32>} : memref<8x128xf32, #tpu.memory_space<vmem>>, vector<8x128xf32>,
    } else {
    }
    %c0 = arith.constant 0 : index
    %c0_1 = arith.constant 0 : index
    %c0_2 = arith.constant 0 : index
    %3 = vector.load %arg2[%c0, %c0_1, %c0_2] : memref<4x8x128xf32, #tpu.memory_space<vmem>>, vector<4x8x128xf32>
    %4 = vector.shape_cast %3 : vector<4x8x128xf32> to vector<32x128xf32>
    %5 = arith.truncf %4 : vector<32x128xf32> to vector<32x128xbf16>
    %c0_3 = arith.constant 0 : index
    %c0_4 = arith.constant 0 : index
    %6 = vector.load %arg4[%c0_3, %c0_4] : memref<128x384xbf16, #tpu.memory_space<vmem>>, vector<128x384xbf16>
    %cst = arith.constant dense<0.000000e+00> : vector<32x384xf32>
    %7 = tpu.matmul %5, %6, %cst {dimension_numbers = #tpu.dot_dimension_numbers<[1], [0], [0], [1], [0, 0, 1, 1], [], []>} : vector<32x128xbf16>, vector<128x384xbf16>, vector<32x384xf32> -> vector<32x384xf32>
    %c0_5 = arith.constant 0 : index
    %c0_6 = arith.constant 0 : index
    %8 = vector.load %arg5[%c0_5, %c0_6] : memref<1x384xf32, #tpu.memory_space<vmem>>, vector<1x384xf32>
    %9 = vector.broadcast %8 : vector<1x384xf32> to vector<32x384xf32>
    %10 = arith.addf %7, %9 : vector<32x384xf32>
    %11 = vector.shape_cast %10 : vector<32x384xf32> to vector<4x8x384xf32>
    %c0_7 = arith.constant 0 : index
    %c0_8 = arith.constant 0 : index
    %c0_9 = arith.constant 0 : index
    %12 = vector.load %arg10[%c0_7, %c0_8, %c0_9] : memref<4x8x384xf32, #tpu.memory_space<vmem>>, vector<4x8x384xf32>
    tpu.vector_store %arg10[%c0_7, %c0_8, %c0_9], %11 {strides = array<i32>} : memref<4x8x384xf32, #tpu.memory_space<vmem>>, vector<4x8x384xf32>,
    %c0_10 = arith.constant 0 : index
    %c0_11 = arith.constant 0 : index
    %13 = vector.load %arg7[%c0_10, %c0_11] : memref<1x128xf32, #tpu.memory_space<vmem>>, vector<1x128xf32>
    %14 = vector.shape_cast %13 : vector<1x128xf32> to vector<1x128xf32>
    %15 = vector.broadcast %14 : vector<1x128xf32> to vector<8x128xf32>
    %c0_12 = arith.constant 0 : index
    %c0_13 = arith.constant 0 : index
    %16 = vector.load %arg9[%c0_12, %c0_13] : memref<8x128xf32, #tpu.memory_space<vmem>>, vector<8x128xf32>
    %c0_i32_14 = arith.constant 0 : i32
    %17 = arith.index_cast %c0_i32_14 : i32 to index
    %c0_15 = arith.constant 0 : index
    %c0_16 = arith.constant 0 : index
    %18 = vector.load %arg10[%17, %c0_15, %c0_16] : memref<4x8x384xf32, #tpu.memory_space<vmem>>, vector<1x8x384xf32>
    %19 = vector.shape_cast %18 : vector<1x8x384xf32> to vector<8x384xf32>
    %20 = arith.truncf %16 : vector<8x128xf32> to vector<8x128xbf16>
    %c0_17 = arith.constant 0 : index
    %c0_18 = arith.constant 0 : index
    %21 = vector.load %arg6[%c0_17, %c0_18] : memref<128x384xbf16, #tpu.memory_space<vmem>>, vector<128x384xbf16>
    %cst_19 = arith.constant dense<0.000000e+00> : vector<8x384xf32>
    %22 = tpu.matmul %20, %21, %cst_19 {dimension_numbers = #tpu.dot_dimension_numbers<[1], [0], [0], [1], [0, 0, 1, 1], [], []>} : vector<8x128xbf16>, vector<128x384xbf16>, vector<8x384xf32> -> vector<8x384xf32>
    %23 = vector.extract_strided_slice %19 {offsets = [0, 0], sizes = [8, 128], strides = [1, 1]} : vector<8x384xf32> to vector<8x128xf32>
    %24 = vector.extract_strided_slice %22 {offsets = [0, 0], sizes = [8, 128], strides = [1, 1]} : vector<8x384xf32> to vector<8x128xf32>
    %25 = arith.addf %23, %24 : vector<8x128xf32>
    %26 = arith.negf %25 : vector<8x128xf32>
    %27 = math.exp %26 : vector<8x128xf32>
    %cst_20 = arith.constant 1.000000e+00 : f32
    %28 = vector.broadcast %cst_20 : f32 to vector<8x128xf32>
    %29 = arith.addf %28, %27 : vector<8x128xf32>
    %30 = arith.divf %28, %29 : vector<8x128xf32>
    %31 = vector.extract_strided_slice %19 {offsets = [0, 128], sizes = [8, 128], strides = [1, 1]} : vector<8x384xf32> to vector<8x128xf32>
    %32 = vector.extract_strided_slice %22 {offsets = [0, 128], sizes = [8, 128], strides = [1, 1]} : vector<8x384xf32> to vector<8x128xf32>
    %33 = arith.addf %31, %32 : vector<8x128xf32>
    %34 = arith.negf %33 : vector<8x128xf32>
    %35 = math.exp %34 : vector<8x128xf32>
    %cst_21 = arith.constant 1.000000e+00 : f32
    %36 = vector.broadcast %cst_21 : f32 to vector<8x128xf32>
    %37 = arith.addf %36, %35 : vector<8x128xf32>
    %38 = arith.divf %36, %37 : vector<8x128xf32>
    %39 = vector.extract_strided_slice %19 {offsets = [0, 256], sizes = [8, 128], strides = [1, 1]} : vector<8x384xf32> to vector<8x128xf32>
    %40 = vector.extract_strided_slice %22 {offsets = [0, 256], sizes = [8, 128], strides = [1, 1]} : vector<8x384xf32> to vector<8x128xf32>
    %41 = arith.addf %40, %15 : vector<8x128xf32>
    %42 = arith.mulf %30, %41 : vector<8x128xf32>
    %43 = arith.addf %39, %42 : vector<8x128xf32>
    %44 = math.tanh %43 : vector<8x128xf32>
    %cst_22 = arith.constant 1.000000e+00 : f32
    %45 = vector.broadcast %cst_22 : f32 to vector<8x128xf32>
    %46 = arith.subf %45, %38 : vector<8x128xf32>
    %47 = arith.mulf %46, %44 : vector<8x128xf32>
    %48 = arith.mulf %38, %16 : vector<8x128xf32>
    %49 = arith.addf %47, %48 : vector<8x128xf32>
    %50 = arith.index_cast %c0_i32_14 : i32 to index
    %c0_23 = arith.constant 0 : index
    %c0_24 = arith.constant 0 : index
    %51 = vector.load %arg8[%50, %c0_23, %c0_24] : memref<4x8x128xf32, #tpu.memory_space<vmem>>, vector<1x8x128xf32>
    %52 = vector.shape_cast %51 : vector<1x8x128xf32> to vector<8x128xf32>
    %53 = vector.shape_cast %49 : vector<8x128xf32> to vector<1x8x128xf32>
    tpu.vector_store %arg8[%50, %c0_23, %c0_24], %53 {strides = array<i32>} : memref<4x8x128xf32, #tpu.memory_space<vmem>>, vector<1x8x128xf32>,
    %c1_i32 = arith.constant 1 : i32
    %54 = arith.index_cast %c1_i32 : i32 to index
    %c0_25 = arith.constant 0 : index
    %c0_26 = arith.constant 0 : index
    %55 = vector.load %arg10[%54, %c0_25, %c0_26] : memref<4x8x384xf32, #tpu.memory_space<vmem>>, vector<1x8x384xf32>
    %56 = vector.shape_cast %55 : vector<1x8x384xf32> to vector<8x384xf32>
    %57 = arith.truncf %49 : vector<8x128xf32> to vector<8x128xbf16>
    %c0_27 = arith.constant 0 : index
    %c0_28 = arith.constant 0 : index
    %58 = vector.load %arg6[%c0_27, %c0_28] : memref<128x384xbf16, #tpu.memory_space<vmem>>, vector<128x384xbf16>
    %cst_29 = arith.constant dense<0.000000e+00> : vector<8x384xf32>
    %59 = tpu.matmul %57, %58, %cst_29 {dimension_numbers = #tpu.dot_dimension_numbers<[1], [0], [0], [1], [0, 0, 1, 1], [], []>} : vector<8x128xbf16>, vector<128x384xbf16>, vector<8x384xf32> -> vector<8x384xf32>
    %60 = vector.extract_strided_slice %56 {offsets = [0, 0], sizes = [8, 128], strides = [1, 1]} : vector<8x384xf32> to vector<8x128xf32>
    %61 = vector.extract_strided_slice %59 {offsets = [0, 0], sizes = [8, 128], strides = [1, 1]} : vector<8x384xf32> to vector<8x128xf32>
    %62 = arith.addf %60, %61 : vector<8x128xf32>
    %63 = arith.negf %62 : vector<8x128xf32>
    %64 = math.exp %63 : vector<8x128xf32>
    %cst_30 = arith.constant 1.000000e+00 : f32
    %65 = vector.broadcast %cst_30 : f32 to vector<8x128xf32>
    %66 = arith.addf %65, %64 : vector<8x128xf32>
    %67 = arith.divf %65, %66 : vector<8x128xf32>
    %68 = vector.extract_strided_slice %56 {offsets = [0, 128], sizes = [8, 128], strides = [1, 1]} : vector<8x384xf32> to vector<8x128xf32>
    %69 = vector.extract_strided_slice %59 {offsets = [0, 128], sizes = [8, 128], strides = [1, 1]} : vector<8x384xf32> to vector<8x128xf32>
    %70 = arith.addf %68, %69 : vector<8x128xf32>
    %71 = arith.negf %70 : vector<8x128xf32>
    %72 = math.exp %71 : vector<8x128xf32>
    %cst_31 = arith.constant 1.000000e+00 : f32
    %73 = vector.broadcast %cst_31 : f32 to vector<8x128xf32>
    %74 = arith.addf %73, %72 : vector<8x128xf32>
    %75 = arith.divf %73, %74 : vector<8x128xf32>
    %76 = vector.extract_strided_slice %56 {offsets = [0, 256], sizes = [8, 128], strides = [1, 1]} : vector<8x384xf32> to vector<8x128xf32>
    %77 = vector.extract_strided_slice %59 {offsets = [0, 256], sizes = [8, 128], strides = [1, 1]} : vector<8x384xf32> to vector<8x128xf32>
    %78 = arith.addf %77, %15 : vector<8x128xf32>
    %79 = arith.mulf %67, %78 : vector<8x128xf32>
    %80 = arith.addf %76, %79 : vector<8x128xf32>
    %81 = math.tanh %80 : vector<8x128xf32>
    %cst_32 = arith.constant 1.000000e+00 : f32
    %82 = vector.broadcast %cst_32 : f32 to vector<8x128xf32>
    %83 = arith.subf %82, %75 : vector<8x128xf32>
    %84 = arith.mulf %83, %81 : vector<8x128xf32>
    %85 = arith.mulf %75, %49 : vector<8x128xf32>
    %86 = arith.addf %84, %85 : vector<8x128xf32>
    %87 = arith.index_cast %c1_i32 : i32 to index
    %c0_33 = arith.constant 0 : index
    %c0_34 = arith.constant 0 : index
    %88 = vector.load %arg8[%87, %c0_33, %c0_34] : memref<4x8x128xf32, #tpu.memory_space<vmem>>, vector<1x8x128xf32>
    %89 = vector.shape_cast %88 : vector<1x8x128xf32> to vector<8x128xf32>
    %90 = vector.shape_cast %86 : vector<8x128xf32> to vector<1x8x128xf32>
    tpu.vector_store %arg8[%87, %c0_33, %c0_34], %90 {strides = array<i32>} : memref<4x8x128xf32, #tpu.memory_space<vmem>>, vector<1x8x128xf32>,
    %c2_i32 = arith.constant 2 : i32
    %91 = arith.index_cast %c2_i32 : i32 to index
    %c0_35 = arith.constant 0 : index
    %c0_36 = arith.constant 0 : index
    %92 = vector.load %arg10[%91, %c0_35, %c0_36] : memref<4x8x384xf32, #tpu.memory_space<vmem>>, vector<1x8x384xf32>
    %93 = vector.shape_cast %92 : vector<1x8x384xf32> to vector<8x384xf32>
    %94 = arith.truncf %86 : vector<8x128xf32> to vector<8x128xbf16>
    %c0_37 = arith.constant 0 : index
    %c0_38 = arith.constant 0 : index
    %95 = vector.load %arg6[%c0_37, %c0_38] : memref<128x384xbf16, #tpu.memory_space<vmem>>, vector<128x384xbf16>
    %cst_39 = arith.constant dense<0.000000e+00> : vector<8x384xf32>
    %96 = tpu.matmul %94, %95, %cst_39 {dimension_numbers = #tpu.dot_dimension_numbers<[1], [0], [0], [1], [0, 0, 1, 1], [], []>} : vector<8x128xbf16>, vector<128x384xbf16>, vector<8x384xf32> -> vector<8x384xf32>
    %97 = vector.extract_strided_slice %93 {offsets = [0, 0], sizes = [8, 128], strides = [1, 1]} : vector<8x384xf32> to vector<8x128xf32>
    %98 = vector.extract_strided_slice %96 {offsets = [0, 0], sizes = [8, 128], strides = [1, 1]} : vector<8x384xf32> to vector<8x128xf32>
    %99 = arith.addf %97, %98 : vector<8x128xf32>
    %100 = arith.negf %99 : vector<8x128xf32>
    %101 = math.exp %100 : vector<8x128xf32>
    %cst_40 = arith.constant 1.000000e+00 : f32
    %102 = vector.broadcast %cst_40 : f32 to vector<8x128xf32>
    %103 = arith.addf %102, %101 : vector<8x128xf32>
    %104 = arith.divf %102, %103 : vector<8x128xf32>
    %105 = vector.extract_strided_slice %93 {offsets = [0, 128], sizes = [8, 128], strides = [1, 1]} : vector<8x384xf32> to vector<8x128xf32>
    %106 = vector.extract_strided_slice %96 {offsets = [0, 128], sizes = [8, 128], strides = [1, 1]} : vector<8x384xf32> to vector<8x128xf32>
    %107 = arith.addf %105, %106 : vector<8x128xf32>
    %108 = arith.negf %107 : vector<8x128xf32>
    %109 = math.exp %108 : vector<8x128xf32>
    %cst_41 = arith.constant 1.000000e+00 : f32
    %110 = vector.broadcast %cst_41 : f32 to vector<8x128xf32>
    %111 = arith.addf %110, %109 : vector<8x128xf32>
    %112 = arith.divf %110, %111 : vector<8x128xf32>
    %113 = vector.extract_strided_slice %93 {offsets = [0, 256], sizes = [8, 128], strides = [1, 1]} : vector<8x384xf32> to vector<8x128xf32>
    %114 = vector.extract_strided_slice %96 {offsets = [0, 256], sizes = [8, 128], strides = [1, 1]} : vector<8x384xf32> to vector<8x128xf32>
    %115 = arith.addf %114, %15 : vector<8x128xf32>
    %116 = arith.mulf %104, %115 : vector<8x128xf32>
    %117 = arith.addf %113, %116 : vector<8x128xf32>
    %118 = math.tanh %117 : vector<8x128xf32>
    %cst_42 = arith.constant 1.000000e+00 : f32
    %119 = vector.broadcast %cst_42 : f32 to vector<8x128xf32>
    %120 = arith.subf %119, %112 : vector<8x128xf32>
    %121 = arith.mulf %120, %118 : vector<8x128xf32>
    %122 = arith.mulf %112, %86 : vector<8x128xf32>
    %123 = arith.addf %121, %122 : vector<8x128xf32>
    %124 = arith.index_cast %c2_i32 : i32 to index
    %c0_43 = arith.constant 0 : index
    %c0_44 = arith.constant 0 : index
    %125 = vector.load %arg8[%124, %c0_43, %c0_44] : memref<4x8x128xf32, #tpu.memory_space<vmem>>, vector<1x8x128xf32>
    %126 = vector.shape_cast %125 : vector<1x8x128xf32> to vector<8x128xf32>
    %127 = vector.shape_cast %123 : vector<8x128xf32> to vector<1x8x128xf32>
    tpu.vector_store %arg8[%124, %c0_43, %c0_44], %127 {strides = array<i32>} : memref<4x8x128xf32, #tpu.memory_space<vmem>>, vector<1x8x128xf32>,
    %c3_i32 = arith.constant 3 : i32
    %128 = arith.index_cast %c3_i32 : i32 to index
    %c0_45 = arith.constant 0 : index
    %c0_46 = arith.constant 0 : index
    %129 = vector.load %arg10[%128, %c0_45, %c0_46] : memref<4x8x384xf32, #tpu.memory_space<vmem>>, vector<1x8x384xf32>
    %130 = vector.shape_cast %129 : vector<1x8x384xf32> to vector<8x384xf32>
    %131 = arith.truncf %123 : vector<8x128xf32> to vector<8x128xbf16>
    %c0_47 = arith.constant 0 : index
    %c0_48 = arith.constant 0 : index
    %132 = vector.load %arg6[%c0_47, %c0_48] : memref<128x384xbf16, #tpu.memory_space<vmem>>, vector<128x384xbf16>
    %cst_49 = arith.constant dense<0.000000e+00> : vector<8x384xf32>
    %133 = tpu.matmul %131, %132, %cst_49 {dimension_numbers = #tpu.dot_dimension_numbers<[1], [0], [0], [1], [0, 0, 1, 1], [], []>} : vector<8x128xbf16>, vector<128x384xbf16>, vector<8x384xf32> -> vector<8x384xf32>
    %134 = vector.extract_strided_slice %130 {offsets = [0, 0], sizes = [8, 128], strides = [1, 1]} : vector<8x384xf32> to vector<8x128xf32>
    %135 = vector.extract_strided_slice %133 {offsets = [0, 0], sizes = [8, 128], strides = [1, 1]} : vector<8x384xf32> to vector<8x128xf32>
    %136 = arith.addf %134, %135 : vector<8x128xf32>
    %137 = arith.negf %136 : vector<8x128xf32>
    %138 = math.exp %137 : vector<8x128xf32>
    %cst_50 = arith.constant 1.000000e+00 : f32
    %139 = vector.broadcast %cst_50 : f32 to vector<8x128xf32>
    %140 = arith.addf %139, %138 : vector<8x128xf32>
    %141 = arith.divf %139, %140 : vector<8x128xf32>
    %142 = vector.extract_strided_slice %130 {offsets = [0, 128], sizes = [8, 128], strides = [1, 1]} : vector<8x384xf32> to vector<8x128xf32>
    %143 = vector.extract_strided_slice %133 {offsets = [0, 128], sizes = [8, 128], strides = [1, 1]} : vector<8x384xf32> to vector<8x128xf32>
    %144 = arith.addf %142, %143 : vector<8x128xf32>
    %145 = arith.negf %144 : vector<8x128xf32>
    %146 = math.exp %145 : vector<8x128xf32>
    %cst_51 = arith.constant 1.000000e+00 : f32
    %147 = vector.broadcast %cst_51 : f32 to vector<8x128xf32>
    %148 = arith.addf %147, %146 : vector<8x128xf32>
    %149 = arith.divf %147, %148 : vector<8x128xf32>
    %150 = vector.extract_strided_slice %130 {offsets = [0, 256], sizes = [8, 128], strides = [1, 1]} : vector<8x384xf32> to vector<8x128xf32>
    %151 = vector.extract_strided_slice %133 {offsets = [0, 256], sizes = [8, 128], strides = [1, 1]} : vector<8x384xf32> to vector<8x128xf32>
    %152 = arith.addf %151, %15 : vector<8x128xf32>
    %153 = arith.mulf %141, %152 : vector<8x128xf32>
    %154 = arith.addf %150, %153 : vector<8x128xf32>
    %155 = math.tanh %154 : vector<8x128xf32>
    %cst_52 = arith.constant 1.000000e+00 : f32
    %156 = vector.broadcast %cst_52 : f32 to vector<8x128xf32>
    %157 = arith.subf %156, %149 : vector<8x128xf32>
    %158 = arith.mulf %157, %155 : vector<8x128xf32>
    %159 = arith.mulf %149, %123 : vector<8x128xf32>
    %160 = arith.addf %158, %159 : vector<8x128xf32>
    %161 = arith.index_cast %c3_i32 : i32 to index
    %c0_53 = arith.constant 0 : index
    %c0_54 = arith.constant 0 : index
    %162 = vector.load %arg8[%161, %c0_53, %c0_54] : memref<4x8x128xf32, #tpu.memory_space<vmem>>, vector<1x8x128xf32>
    %163 = vector.shape_cast %162 : vector<1x8x128xf32> to vector<8x128xf32>
    %164 = vector.shape_cast %160 : vector<8x128xf32> to vector<1x8x128xf32>
    tpu.vector_store %arg8[%161, %c0_53, %c0_54], %164 {strides = array<i32>} : memref<4x8x128xf32, #tpu.memory_space<vmem>>, vector<1x8x128xf32>,
    %c4_i32 = arith.constant 4 : i32
    %c0_55 = arith.constant 0 : index
    %c0_56 = arith.constant 0 : index
    %165 = vector.load %arg9[%c0_55, %c0_56] : memref<8x128xf32, #tpu.memory_space<vmem>>, vector<8x128xf32>
    tpu.vector_store %arg9[%c0_55, %c0_56], %160 {strides = array<i32>} : memref<8x128xf32, #tpu.memory_space<vmem>>, vector<8x128xf32>,
    return
  }
  func.func @transform_0(%arg0: i32, %arg1: i32) -> (i32, i32, i32) {
    %c0_i32 = arith.constant 0 : i32
    %c0_i32_0 = arith.constant 0 : i32
    return %arg1, %arg0, %c0_i32 : i32, i32, i32
  }
  func.func @transform_1(%arg0: i32, %arg1: i32) -> (i32, i32) {
    %c0_i32 = arith.constant 0 : i32
    %c0_i32_0 = arith.constant 0 : i32
    return %arg0, %c0_i32 : i32, i32
  }
  func.func @transform_2(%arg0: i32, %arg1: i32) -> (i32, i32) {
    %c0_i32 = arith.constant 0 : i32
    %c0_i32_0 = arith.constant 0 : i32
    %c0_i32_1 = arith.constant 0 : i32
    return %c0_i32, %c0_i32_0 : i32, i32
  }
  func.func @transform_3(%arg0: i32, %arg1: i32) -> (i32, i32) {
    %c0_i32 = arith.constant 0 : i32
    %c0_i32_0 = arith.constant 0 : i32
    %c0_i32_1 = arith.constant 0 : i32
    return %c0_i32, %c0_i32_0 : i32, i32
  }
  func.func @transform_4(%arg0: i32, %arg1: i32) -> (i32, i32) {
    %c0_i32 = arith.constant 0 : i32
    %c0_i32_0 = arith.constant 0 : i32
    %c0_i32_1 = arith.constant 0 : i32
    return %c0_i32, %c0_i32_0 : i32, i32
  }
  func.func @transform_5(%arg0: i32, %arg1: i32) -> (i32, i32) {
    %c0_i32 = arith.constant 0 : i32
    %c0_i32_0 = arith.constant 0 : i32
    %c0_i32_1 = arith.constant 0 : i32
    return %c0_i32, %c0_i32_0 : i32, i32
  }
  func.func @transform_6(%arg0: i32, %arg1: i32) -> (i32, i32, i32) {
    %c0_i32 = arith.constant 0 : i32
    %c0_i32_0 = arith.constant 0 : i32
    return %arg1, %arg0, %c0_i32 : i32, i32, i32
  }
}

</mosaic_0001>

<llo_original>
// kernel: tpu_custom_call.1
$region0: #{tpu_custom_call.1}
  #allocation0 [shape = 'u32[]', space=smem, size = 0x4, offset = 0x4, fixed_abs, tag = 'smem constant byte address 0x4 - core index']
  #allocation1 [shape = 'u32[144,128]{1,0:T(1,128)}', space=vmem, size = 0x12000, scoped, tag = 'internal scratch']
  #allocation2 [shape = 'f32[8,128]{1,0:T(8,128)}', space=vmem, size = 0x1000, scoped, tag = 'scratch operand']
  #allocation3 [shape = 'f32[4,8,384]{2,1,0:T(8,128)}', space=vmem, size = 0xc000, scoped, tag = 'scratch operand']
  %s0 = inlined_call_operand.hbm [shape: f32[8,8,128], index: 0, kind: input, shape index: {}]
  %s1 = inlined_call_operand.hbm [shape: f32[8,128], index: 1, kind: input, shape index: {}]
  %s2 = inlined_call_operand.hbm [shape: bf16[128,384], index: 2, kind: input, shape index: {}]
  %s3 = inlined_call_operand.vmem [shape: f32[1,384], index: 3, kind: input, shape index: {}]
  %s4 = inlined_call_operand.hbm [shape: bf16[128,384], index: 4, kind: input, shape index: {}]
  %s5 = inlined_call_operand.vmem [shape: f32[1,128], index: 5, kind: input, shape index: {}]
  %s6 = inlined_call_operand.hbm [shape: f32[8,8,128], index: 6, kind: output, shape index: {}]
  %s7 = sld [smem:[#allocation0]]
  $region77: #{tpu_custom_call.1} parent=0
    _
  %s9 = ssub.s32 1, %s7
  %s10 = scalar_select 0, %s9, %s7
  $region1: #{tpu_custom_call.1} parent=0
    #allocation4 [shape = 'u8[32768]{0}', space=vmem, size = 0x8000, scoped, tag = 'input window, operand 0']
    #allocation5 [shape = 's32[2]{0}', space=sflag, size = 0x8, scoped, tag = 'scoped memory for tpu_custom_call.1']
    #allocation6 [shape = 's32[2]{0}', space=sflag, size = 0x8, scoped, tag = 'scoped memory for tpu_custom_call.1']
    #allocation7 [shape = 'u8[4096]{0}', space=vmem, size = 0x1000, scoped, tag = 'input window, operand 1, single buffered']
    #allocation8 [shape = 's32[1]{0}', space=sflag, size = 0x4, scoped, tag = 'scoped memory for tpu_custom_call.1']
    #allocation9 [shape = 'u8[98304]{0}', space=vmem, size = 0x18000, scoped, tag = 'input window, operand 2, single buffered']
    #allocation10 [shape = 'u8[98304]{0}', space=vmem, size = 0x18000, scoped, tag = 'input window, operand 4, single buffered']
    #allocation11 [shape = 's32[1]{0}', space=sflag, size = 0x4, scoped, tag = 'scoped memory for tpu_custom_call.1']
    #allocation12 [shape = 'u8[32768]{0}', space=vmem, size = 0x8000, scoped, tag = 'output window, operand 0']
    %11 = vsyncpa [#allocation5], 0
    %s12 = scalar_lea.sflag [#allocation5], 1
    %13 = vsyncpa %s12, 0
    %14 = vsyncpa [#allocation8], 0
    %15 = vsyncpa [#allocation11], 0
    %16 = vsyncpa [#allocation6], 0
    %s17 = scalar_lea.sflag [#allocation6], 1
    %18 = vsyncpa %s17, 0
    loop: start=0, step=1, limit=4
    $region2: #{tpu_custom_call.1} parent=1 // loop_pre_header
      _
    $region3: #{tpu_custom_call.1} parent=1 // loop_header
      %s20 = sphi 0, %s24
      %p21 = scmp.ge.s32.totalorder %s20, 4
      %s27 = sphi 0, %s39
      %s28 = sphi 0, %s35
      %s29 = sphi 0, %s27
      %s30 = sphi 0, %s28
      %s31 = sphi 0, %s29
      %s32 = sphi 0, %s30
      %s44 = sphi 0, %s46
      %s47 = sphi 0, %s44
      %s48 = sphi 0, %s47
      %s64 = sphi 0, %s48
      %s70 = sphi 0, %s72
      %s73 = sphi 0, %s70
      %s74 = sphi 0, %s73
      %s90 = sphi 0, %s74
      %s94 = sphi 0, %s94
      %s96 = sphi 0, %s94
      %s97 = sphi 0, %s96
      %s111 = sphi 0, %s97
      %s115 = sphi 0, %s115
      %s117 = sphi 0, %s115
      %s118 = sphi 0, %s117
      %s132 = sphi 0, %s118
      %s136 = sphi 0, %s136
      %s138 = sphi 0, %s136
      %s139 = sphi 0, %s138
      %s153 = sphi 0, %s139
      %s157 = sphi 0, %s157
      %s159 = sphi 0, %s157
      %s160 = sphi 0, %s159
      %s174 = sphi 0, %s160
      %s182 = sphi 0, %s184
      %s185 = sphi 0, %s182
      %s186 = sphi 0, %s185
      %s202 = sphi 0, %s186
    $region4: #{tpu_custom_call.1} parent=1 // loop_header_branch
      %23 = sbr.rel (%p21) target = $region8
    $region5: #{tpu_custom_call.1} parent=1 // loop_body
      %s25 = ssub.s32 %s20, 1
      %s26 = ssub.s32 %s20, 2
      %s33 = sadd.s32 1, %s28
      %p34 = scmp.ge.s32.totalorder %s33, 2
      %s35 = scalar_select %p34, 0, %s33
      %s36 = sadd.s32 1, %s27
      %s37 = scalar_select %p34, %s36, %s27
      %p38 = scmp.ge.s32.totalorder %s37, 1
      %s39 = scalar_select %p38, 0, %s37
      %s40 = ssub.s32 %s28, %s35
      %s41 = ssub.s32 %s27, %s39
      %s42 = sor.u32 %s40, %s41
      %p43 = scmp.eq.s32.totalorder %s42, 0
      %s45 = sadd.s32 %s44, 1
      %s46 = scalar_select %p43, %s44, %s45
      %p49 = pneg %p43
      %p50 = scmp.eq.s32.totalorder %s20, 1
      %p51 = por %p49, %p50
      %p52 = scmp.ne.s32.totalorder %s44, %s47
      %p53 = scmp.eq.s32.totalorder %s20, 0
      %p54 = por %p52, %p53
      %p55 = scmp.ne.s32.totalorder %s44, %s47
      %p56 = scmp.eq.s32.totalorder %s25, 1
      %p57 = por %p55, %p56
      %p58 = scmp.ne.s32.totalorder %s47, %s48
      %p59 = scmp.eq.s32.totalorder %s25, 0
      %p60 = por %p58, %p59
      %p61 = scmp.ne.s32.totalorder %s47, %s48
      %p62 = scmp.eq.s32.totalorder %s26, 1
      %p63 = por %p61, %p62
      %p65 = scmp.ne.s32.totalorder %s48, %s64
      %p66 = scmp.eq.s32.totalorder %s26, 0
      %p67 = por %p65, %p66
      %s68 = ssub.s32 %s27, %s39
      %p69 = scmp.eq.s32.totalorder %s68, 0
      %s71 = sadd.s32 %s70, 1
      %s72 = scalar_select %p69, %s70, %s71
      %p75 = pneg %p69
      %p76 = scmp.eq.s32.totalorder %s20, 1
      %p77 = por %p75, %p76
      %p78 = scmp.ne.s32.totalorder %s70, %s73
      %p79 = scmp.eq.s32.totalorder %s20, 0
      %p80 = por %p78, %p79
      %p81 = scmp.ne.s32.totalorder %s70, %s73
      %p82 = scmp.eq.s32.totalorder %s25, 1
      %p83 = por %p81, %p82
      %p84 = scmp.ne.s32.totalorder %s73, %s74
      %p85 = scmp.eq.s32.totalorder %s25, 0
      %p86 = por %p84, %p85
      %p87 = scmp.ne.s32.totalorder %s73, %s74
      %p88 = scmp.eq.s32.totalorder %s26, 1
      %p89 = por %p87, %p88
      %p91 = scmp.ne.s32.totalorder %s74, %s90
      %p92 = scmp.eq.s32.totalorder %s26, 0
      %p93 = por %p91, %p92
      %s95 = sadd.s32 %s94, 1
      %p98 = scmp.eq.s32.totalorder %s20, 1
      %p99 = scmp.ne.s32.totalorder %s94, %s96
      %p100 = scmp.eq.s32.totalorder %s20, 0
      %p101 = por %p99, %p100
      %p102 = scmp.ne.s32.totalorder %s94, %s96
      %p103 = scmp.eq.s32.totalorder %s25, 1
      %p104 = por %p102, %p103
      %p105 = scmp.ne.s32.totalorder %s96, %s97
      %p106 = scmp.eq.s32.totalorder %s25, 0
      %p107 = por %p105, %p106
      %p108 = scmp.ne.s32.totalorder %s96, %s97
      %p109 = scmp.eq.s32.totalorder %s26, 1
      %p110 = por %p108, %p109
      %p112 = scmp.ne.s32.totalorder %s97, %s111
      %p113 = scmp.eq.s32.totalorder %s26, 0
      %p114 = por %p112, %p113
      %s116 = sadd.s32 %s115, 1
      %p119 = scmp.eq.s32.totalorder %s20, 1
      %p120 = scmp.ne.s32.totalorder %s115, %s117
      %p121 = scmp.eq.s32.totalorder %s20, 0
      %p122 = por %p120, %p121
      %p123 = scmp.ne.s32.totalorder %s115, %s117
      %p124 = scmp.eq.s32.totalorder %s25, 1
      %p125 = por %p123, %p124
      %p126 = scmp.ne.s32.totalorder %s117, %s118
      %p127 = scmp.eq.s32.totalorder %s25, 0
      %p128 = por %p126, %p127
      %p129 = scmp.ne.s32.totalorder %s117, %s118
      %p130 = scmp.eq.s32.totalorder %s26, 1
      %p131 = por %p129, %p130
      %p133 = scmp.ne.s32.totalorder %s118, %s132
      %p134 = scmp.eq.s32.totalorder %s26, 0
      %p135 = por %p133, %p134
      %s137 = sadd.s32 %s136, 1
      %p140 = scmp.eq.s32.totalorder %s20, 1
      %p141 = scmp.ne.s32.totalorder %s136, %s138
      %p142 = scmp.eq.s32.totalorder %s20, 0
      %p143 = por %p141, %p142
      %p144 = scmp.ne.s32.totalorder %s136, %s138
      %p145 = scmp.eq.s32.totalorder %s25, 1
      %p146 = por %p144, %p145
      %p147 = scmp.ne.s32.totalorder %s138, %s139
      %p148 = scmp.eq.s32.totalorder %s25, 0
      %p149 = por %p147, %p148
      %p150 = scmp.ne.s32.totalorder %s138, %s139
      %p151 = scmp.eq.s32.totalorder %s26, 1
      %p152 = por %p150, %p151
      %p154 = scmp.ne.s32.totalorder %s139, %s153
      %p155 = scmp.eq.s32.totalorder %s26, 0
      %p156 = por %p154, %p155
      %s158 = sadd.s32 %s157, 1
      %p161 = scmp.eq.s32.totalorder %s20, 1
      %p162 = scmp.ne.s32.totalorder %s157, %s159
      %p163 = scmp.eq.s32.totalorder %s20, 0
      %p164 = por %p162, %p163
      %p165 = scmp.ne.s32.totalorder %s157, %s159
      %p166 = scmp.eq.s32.totalorder %s25, 1
      %p167 = por %p165, %p166
      %p168 = scmp.ne.s32.totalorder %s159, %s160
      %p169 = scmp.eq.s32.totalorder %s25, 0
      %p170 = por %p168, %p169
      %p171 = scmp.ne.s32.totalorder %s159, %s160
      %p172 = scmp.eq.s32.totalorder %s26, 1
      %p173 = por %p171, %p172
      %p175 = scmp.ne.s32.totalorder %s160, %s174
      %p176 = scmp.eq.s32.totalorder %s26, 0
      %p177 = por %p175, %p176
      %s178 = ssub.s32 %s28, %s35
      %s179 = ssub.s32 %s27, %s39
      %s180 = sor.u32 %s178, %s179
      %p181 = scmp.eq.s32.totalorder %s180, 0
      %s183 = sadd.s32 %s182, 1
      %s184 = scalar_select %p181, %s182, %s183
      %p187 = pneg %p181
      %p188 = scmp.eq.s32.totalorder %s20, 1
      %p189 = por %p187, %p188
      %p190 = scmp.ne.s32.totalorder %s182, %s185
      %p191 = scmp.eq.s32.totalorder %s20, 0
      %p192 = por %p190, %p191
      %p193 = scmp.ne.s32.totalorder %s182, %s185
      %p194 = scmp.eq.s32.totalorder %s25, 1
      %p195 = por %p193, %p194
      %p196 = scmp.ne.s32.totalorder %s185, %s186
      %p197 = scmp.eq.s32.totalorder %s25, 0
      %p198 = por %p196, %p197
      %p199 = scmp.ne.s32.totalorder %s185, %s186
      %p200 = scmp.eq.s32.totalorder %s26, 1
      %p201 = por %p199, %p200
      %p203 = scmp.ne.s32.totalorder %s186, %s202
      %p204 = scmp.eq.s32.totalorder %s26, 0
      %p205 = por %p203, %p204
      %p206 = scmp.le.s32.totalorder 1, %s20
      %p207 = scmp.lt.s32.totalorder %s20, 3
      %p208 = pnand %p206, %p207
      %p209 = pneg %p208
      // Predicated region
      $region9: #{tpu_custom_call.1} parent=5 // pred_check
        _
      $region10: #{tpu_custom_call.1} parent=5 // pred_check_branch
        %211 = sbr.rel (%p208) target = $region12
      $region11: #{tpu_custom_call.1} parent=5 // pred_region
        %s212 = ssub.s32 %s20, 1
        // Predicated region
        $region13: #{tpu_custom_call.1} parent=11 // pred_check
          %p213 = pneg %p86
        $region14: #{tpu_custom_call.1} parent=11 // pred_check_branch
          %215 = sbr.rel (%p213) target = $region16
        $region15: #{tpu_custom_call.1} parent=11 // pred_region
          %s217 = ssub.s32 128, 128
          %218 = vsyncadd [#allocation8], %s217
          %s219 = smul.addr %s29, 128
          %s220 = scalar_lea.hbm %s1, %s219
          %s222 = sshll.u32 [#allocation7], 4
          %s223 = int_to_ptr.vmem [resolvable:$true] %s222
          %225 = dma.hbm_to_vmem [thread:$0]  %s220, 128, %s223, [#allocation8]
        $region16: #{tpu_custom_call.1} parent=11 // pred_fallthru
          _
        // Predicated region
        $region17: #{tpu_custom_call.1} parent=11 // pred_check
          %p226 = pneg %p107
        $region18: #{tpu_custom_call.1} parent=11 // pred_check_branch
          %228 = sbr.rel (%p226) target = $region20
        $region19: #{tpu_custom_call.1} parent=11 // pred_region
          %s230 = ssub.s32 3072, 3072
          %231 = vsyncadd [#allocation8], %s230
          %s232 = sshll.u32 [#allocation9], 4
          %s233 = int_to_ptr.vmem [resolvable:$true] %s232
          %238 = dma.hbm_to_vmem [thread:$0]  %s2, 3072, %s233, [#allocation8], 192, 192, 12
        $region20: #{tpu_custom_call.1} parent=11 // pred_fallthru
          _
        // Predicated region
        $region21: #{tpu_custom_call.1} parent=11 // pred_check
          %p239 = pneg %p128
        $region22: #{tpu_custom_call.1} parent=11 // pred_check_branch
          %241 = sbr.rel (%p239) target = $region24
        $region23: #{tpu_custom_call.1} parent=11 // pred_region
          _
        $region24: #{tpu_custom_call.1} parent=11 // pred_fallthru
          _
        // Predicated region
        $region25: #{tpu_custom_call.1} parent=11 // pred_check
          %p242 = pneg %p149
        $region26: #{tpu_custom_call.1} parent=11 // pred_check_branch
          %244 = sbr.rel (%p242) target = $region28
        $region27: #{tpu_custom_call.1} parent=11 // pred_region
          %s246 = ssub.s32 3072, 3072
          %247 = vsyncadd [#allocation11], %s246
          %s248 = sshll.u32 [#allocation10], 4
          %s249 = int_to_ptr.vmem [resolvable:$true] %s248
          %254 = dma.hbm_to_vmem [thread:$0]  %s4, 3072, %s249, [#allocation11], 192, 192, 12
        $region28: #{tpu_custom_call.1} parent=11 // pred_fallthru
          _
        // Predicated region
        $region29: #{tpu_custom_call.1} parent=11 // pred_check
          %p255 = pneg %p170
        $region30: #{tpu_custom_call.1} parent=11 // pred_check_branch
          %257 = sbr.rel (%p255) target = $region32
        $region31: #{tpu_custom_call.1} parent=11 // pred_region
          _
        $region32: #{tpu_custom_call.1} parent=11 // pred_fallthru
          _
      $region12: #{tpu_custom_call.1} parent=5 // pred_fallthru
        _
      %p258 = scmp.lt.s32.totalorder %s20, 2
      // Predicated region
      $region33: #{tpu_custom_call.1} parent=5 // pred_check
        %p259 = pneg %p258
      $region34: #{tpu_custom_call.1} parent=5 // pred_check_branch
        %261 = sbr.rel (%p259) target = $region36
      $region35: #{tpu_custom_call.1} parent=5 // pred_region
        // Predicated region
        $region37: #{tpu_custom_call.1} parent=35 // pred_check
          %p262 = pneg %p54
        $region38: #{tpu_custom_call.1} parent=35 // pred_check_branch
          %264 = sbr.rel (%p262) target = $region40
        $region39: #{tpu_custom_call.1} parent=35 // pred_region
          %s265 = sand.u32 %s44, 1
          %s266 = scalar_lea.sflag [#allocation5], %s265
          %s267 = sand.u32 %s44, 1
          %s268 = smul.addr %s267, 32
          %s269 = scalar_lea.vmem [#allocation4], %s268
          %s270 = smul.u32 4, %s28
          %s272 = ssub.s32 512, 512
          %273 = vsyncadd %s266, %s272
          %s274 = sadd.s32 %s27, %s270
          %s275 = smul.addr %s274, 128
          %s276 = scalar_lea.hbm %s0, %s275
          %s277 = sshll.u32 %s269, 4
          %s278 = int_to_ptr.vmem [resolvable:$true] %s277
          %283 = dma.hbm_to_vmem [thread:$0]  %s276, 512, %s278, %s266, 128, 128, 8
        $region40: #{tpu_custom_call.1} parent=35 // pred_fallthru
          _
      $region36: #{tpu_custom_call.1} parent=5 // pred_fallthru
        _
      %p284 = scmp.le.s32.totalorder 1, %s20
      %p285 = scmp.lt.s32.totalorder %s20, 3
      %p286 = pnand %p284, %p285
      %p287 = pneg %p286
      // Predicated region
      $region41: #{tpu_custom_call.1} parent=5 // pred_check
        _
      $region42: #{tpu_custom_call.1} parent=5 // pred_check_branch
        %289 = sbr.rel (%p286) target = $region44
      $region43: #{tpu_custom_call.1} parent=5 // pred_region
        %s290 = ssub.s32 %s20, 1
        %s291 = sand.u32 %s47, 1
        %s292 = scalar_lea.sflag [#allocation5], %s291
        %s293 = sand.u32 %s47, 1
        %s294 = smul.addr %s293, 32
        %s295 = scalar_lea.vmem [#allocation4], %s294
        // Predicated region
        $region45: #{tpu_custom_call.1} parent=43 // pred_check
          %p296 = pneg %p60
        $region46: #{tpu_custom_call.1} parent=43 // pred_check_branch
          %298 = sbr.rel (%p296) target = $region48
        $region47: #{tpu_custom_call.1} parent=43 // pred_region
          %299 = dma.done %s292, 512
        $region48: #{tpu_custom_call.1} parent=43 // pred_fallthru
          _
        // Predicated region
        $region49: #{tpu_custom_call.1} parent=43 // pred_check
          %p300 = pneg %p86
        $region50: #{tpu_custom_call.1} parent=43 // pred_check_branch
          %302 = sbr.rel (%p300) target = $region52
        $region51: #{tpu_custom_call.1} parent=43 // pred_region
          %303 = dma.done [#allocation8], 128
        $region52: #{tpu_custom_call.1} parent=43 // pred_fallthru
          _
        // Predicated region
        $region53: #{tpu_custom_call.1} parent=43 // pred_check
          %p304 = pneg %p107
        $region54: #{tpu_custom_call.1} parent=43 // pred_check_branch
          %306 = sbr.rel (%p304) target = $region56
        $region55: #{tpu_custom_call.1} parent=43 // pred_region
          %307 = dma.done [#allocation8], 3072
        $region56: #{tpu_custom_call.1} parent=43 // pred_fallthru
          _
        // Predicated region
        $region57: #{tpu_custom_call.1} parent=43 // pred_check
          %p308 = pneg %p149
        $region58: #{tpu_custom_call.1} parent=43 // pred_check_branch
          %310 = sbr.rel (%p308) target = $region60
        $region59: #{tpu_custom_call.1} parent=43 // pred_region
          %311 = dma.done [#allocation11], 3072
        $region60: #{tpu_custom_call.1} parent=43 // pred_fallthru
          _
        %s312 = sand.u32 %s47, 1
        %s313 = scalar_lea.sflag [#allocation5], %s312
        %s314 = sand.u32 %s47, 1
        %s315 = smul.addr %s314, 32
        %s316 = scalar_lea.vmem [#allocation4], %s315
        %p317 = pneg %p60
        %p318 = pneg %p57
        %p319 = pneg %p86
        %p320 = pneg %p83
        %p321 = pneg %p107
        %p322 = pneg %p104
        %p323 = pneg %p128
        %p324 = pneg %p125
        %p325 = pneg %p149
        %p326 = pneg %p146
        %p327 = pneg %p170
        %p328 = pneg %p167
        %p329 = pneg %p198
        %p330 = pneg %p195
        %s331 = sand.u32 %s185, 1
        %s332 = scalar_lea.sflag [#allocation6], %s331
        %s333 = sand.u32 %s185, 1
        %s334 = smul.addr %s333, 32
        %s335 = scalar_lea.vmem [#allocation12], %s334
        %s336 = smul.u32 4, %s30
        %s337 = smul.u32 4, %s30
        %p339 = scmp.eq.s32.totalorder %s30, 0
        // Predicated region
        $region61: #{tpu_custom_call.1} parent=43 // pred_check
          %p340 = pneg %p339
        $region62: #{tpu_custom_call.1} parent=43 // pred_check_branch
          %342 = sbr.rel (%p340) target = $region64
        $region63: #{tpu_custom_call.1} parent=43 // pred_region
          %v343 = vld [vmem:[#allocation7] sm:$0xff]
          %344 = vst [vmem:[#allocation2] sm:$0xff] %v343
        $region64: #{tpu_custom_call.1} parent=43 // pred_fallthru
          _
        %v345 = vld [vmem:[%s295] sm:$0xff]
        %v346 = vld [vmem:[%s295 + $0x8] sm:$0xff]
        %v347 = vld [vmem:[%s295 + $0x10] sm:$0xff]
        %v348 = vld [vmem:[%s295 + $0x18] sm:$0xff]
        %v349 = vpack.c.bf16 %v346, %v345
        %v350 = vpack.c.bf16 %v348, %v347
        %v351 = vld [vmem:[#allocation9] sm:$0xff]
        %v352 = vld [vmem:[#allocation9 + $0x8] sm:$0xf]
        %v353 = vld [vmem:[#allocation9 + $0xc] sm:$0xff]
        %v354 = vld [vmem:[#allocation9 + $0x14] sm:$0xf]
        %v355 = vld [vmem:[#allocation9 + $0x18] sm:$0xff]
        %v356 = vld [vmem:[#allocation9 + $0x20] sm:$0xf]
        %v357 = vld [vmem:[#allocation9 + $0x24] sm:$0xff]
        %v358 = vld [vmem:[#allocation9 + $0x2c] sm:$0xf]
        %v359 = vld [vmem:[#allocation9 + $0x30] sm:$0xff]
        %v360 = vld [vmem:[#allocation9 + $0x38] sm:$0xf]
        %v361 = vld [vmem:[#allocation9 + $0x3c] sm:$0xff]
        %v362 = vld [vmem:[#allocation9 + $0x44] sm:$0xf]
        %v363 = vld [vmem:[#allocation9 + $0x48] sm:$0xff]
        %v364 = vld [vmem:[#allocation9 + $0x50] sm:$0xf]
        %v365 = vld [vmem:[#allocation9 + $0x54] sm:$0xff]
        %v366 = vld [vmem:[#allocation9 + $0x5c] sm:$0xf]
        %v367 = vld [vmem:[#allocation9 + $0x60] sm:$0xff]
        %v368 = vld [vmem:[#allocation9 + $0x68] sm:$0xf]
        %v369 = vld [vmem:[#allocation9 + $0x6c] sm:$0xff]
        %v370 = vld [vmem:[#allocation9 + $0x74] sm:$0xf]
        %v371 = vld [vmem:[#allocation9 + $0x78] sm:$0xff]
        %v372 = vld [vmem:[#allocation9 + $0x80] sm:$0xf]
        %v373 = vld [vmem:[#allocation9 + $0x84] sm:$0xff]
        %v374 = vld [vmem:[#allocation9 + $0x8c] sm:$0xf]
        %v375 = vld [vmem:[#allocation9 + $0x90] sm:$0xff]
        %v376 = vld [vmem:[#allocation9 + $0x98] sm:$0xf]
        %v377 = vld [vmem:[#allocation9 + $0x9c] sm:$0xff]
        %v378 = vld [vmem:[#allocation9 + $0xa4] sm:$0xf]
        %v379 = vld [vmem:[#allocation9 + $0xa8] sm:$0xff]
        %v380 = vld [vmem:[#allocation9 + $0xb0] sm:$0xf]
        %v381 = vld [vmem:[#allocation9 + $0xb4] sm:$0xff]
        %v382 = vld [vmem:[#allocation9 + $0xbc] sm:$0xf]
        %v383 = vld [vmem:[%s3] sm:$0x7]
        %v385 = vlaneseq
        %v386 = vshrl.u32 %v385, 7
        %v387 = vsub.s32 0, %v386
        %v388 = vrot.slane %v383, %v387
        %v389 = vlaneseq
        %v390 = vshrl.u32 %v389, 7
        %v391 = vsub.s32 1, %v390
        %v392 = vrot.slane %v383, %v391
        %v393 = vlaneseq
        %v394 = vshrl.u32 %v393, 7
        %v395 = vsub.s32 2, %v394
        %v396 = vrot.slane %v383, %v395
        %v432 = vunpack.c.l.b16 %v351
        %v433 = vunpack.c.h.b16 %v351
        %v434 = vunpack.c.l.b16 %v352
        %v435 = vunpack.c.l.b16 %v353
        %v436 = vunpack.c.h.b16 %v353
        %v437 = vunpack.c.l.b16 %v354
        %v438 = vunpack.c.l.b16 %v355
        %v439 = vunpack.c.h.b16 %v355
        %v440 = vunpack.c.l.b16 %v356
        %v441 = vunpack.c.l.b16 %v357
        %v442 = vunpack.c.h.b16 %v357
        %v443 = vunpack.c.l.b16 %v358
        %v444 = vunpack.c.l.b16 %v359
        %v445 = vunpack.c.h.b16 %v359
        %v446 = vunpack.c.l.b16 %v360
        %v447 = vunpack.c.l.b16 %v361
        %v448 = vunpack.c.h.b16 %v361
        %v449 = vunpack.c.l.b16 %v362
        %v450 = vunpack.c.l.b16 %v363
        %v451 = vunpack.c.h.b16 %v363
        %v452 = vunpack.c.l.b16 %v364
        %v453 = vunpack.c.l.b16 %v365
        %v454 = vunpack.c.h.b16 %v365
        %v455 = vunpack.c.l.b16 %v366
        %v456 = vunpack.c.l.b16 %v367
        %v457 = vunpack.c.h.b16 %v367
        %v458 = vunpack.c.l.b16 %v368
        %v459 = vunpack.c.l.b16 %v369
        %v460 = vunpack.c.h.b16 %v369
        %v461 = vunpack.c.l.b16 %v370
        %v462 = vunpack.c.l.b16 %v371
        %v463 = vunpack.c.h.b16 %v371
        %v464 = vunpack.c.l.b16 %v372
        %v465 = vunpack.c.l.b16 %v373
        %v466 = vunpack.c.h.b16 %v373
        %v467 = vunpack.c.l.b16 %v374
        %v468 = vunpack.c.l.b16 %v375
        %v469 = vunpack.c.h.b16 %v375
        %v470 = vunpack.c.l.b16 %v376
        %v471 = vunpack.c.l.b16 %v377
        %v472 = vunpack.c.h.b16 %v377
        %v473 = vunpack.c.l.b16 %v378
        %v474 = vunpack.c.l.b16 %v379
        %v475 = vunpack.c.h.b16 %v379
        %v476 = vunpack.c.l.b16 %v380
        %v477 = vunpack.c.l.b16 %v381
        %v478 = vunpack.c.h.b16 %v381
        %v479 = vunpack.c.l.b16 %v382
        %v480 = vpack.c.b16 %v435, %v432
        %v481 = vpack.c.b16 %v436, %v433
        %v482 = vpack.c.b16 %v437, %v434
        %v483 = vpack.c.b16 %v441, %v438
        %v484 = vpack.c.b16 %v442, %v439
        %v485 = vpack.c.b16 %v443, %v440
        %v486 = vpack.c.b16 %v447, %v444
        %v487 = vpack.c.b16 %v448, %v445
        %v488 = vpack.c.b16 %v449, %v446
        %v489 = vpack.c.b16 %v453, %v450
        %v490 = vpack.c.b16 %v454, %v451
        %v491 = vpack.c.b16 %v455, %v452
        %v492 = vpack.c.b16 %v459, %v456
        %v493 = vpack.c.b16 %v460, %v457
        %v494 = vpack.c.b16 %v461, %v458
        %v495 = vpack.c.b16 %v465, %v462
        %v496 = vpack.c.b16 %v466, %v463
        %v497 = vpack.c.b16 %v467, %v464
        %v498 = vpack.c.b16 %v471, %v468
        %v499 = vpack.c.b16 %v472, %v469
        %v500 = vpack.c.b16 %v473, %v470
        %v501 = vpack.c.b16 %v477, %v474
        %v502 = vpack.c.b16 %v478, %v475
        %v503 = vpack.c.b16 %v479, %v476
        %528 = vmatprep.subr.bf16.mxu0 %v481
        %529 = vmatpush1.bf16.msra.mxu0 %v480
        %530 = vmatprep.subr.bf16.mxu0 %v484
        %531 = vmatpush1.bf16.msra.mxu0 %v483
        %532 = vmatprep.subr.bf16.mxu0 %v487
        %533 = vmatpush1.bf16.msra.mxu0 %v486
        %534 = vmatprep.subr.bf16.mxu0 %v490
        %535 = vmatpush1.bf16.msra.mxu0 %v489
        %536 = vmatprep.subr.bf16.mxu0 %v493
        %537 = vmatpush1.bf16.msra.mxu0 %v492
        %538 = vmatprep.subr.bf16.mxu0 %v496
        %539 = vmatpush1.bf16.msra.mxu0 %v495
        %540 = vmatprep.subr.bf16.mxu0 %v499
        %541 = vmatpush1.bf16.msra.mxu0 %v498
        %542 = vmatprep.subr.bf16.mxu0 %v502
        %543 = vmatpush1.bf16.msra.mxu0 %v501
        %544 = vmatprep.subr.bf16.mxu0 0
        %545 = vmatpush1.bf16.msra.mxu0 0
        %546 = vmatprep.subr.bf16.mxu0 0
        %547 = vmatpush1.bf16.msra.mxu0 0
        %548 = vmatprep.subr.bf16.mxu0 0
        %549 = vmatpush1.bf16.msra.mxu0 0
        %550 = vmatprep.subr.bf16.mxu0 0
        %551 = vmatpush1.bf16.msra.mxu0 0
        %552 = vmatprep.subr.bf16.mxu0 0
        %553 = vmatpush1.bf16.msra.mxu0 0
        %554 = vmatprep.subr.bf16.mxu0 0
        %555 = vmatpush1.bf16.msra.mxu0 0
        %556 = vmatprep.subr.bf16.mxu0 0
        %557 = vmatpush1.bf16.msra.mxu0 0
        %558 = vmatprep.subr.bf16.mxu0 0
        %559 = vmatpush1.bf16.msra.mxu0 0
        %560 = vmatprep.mubr.bf16.mxu0 0
        %561 = vmatmul.mubr.bf16.gmra.mrb[0].mxu0 %v349
        %v562 = vpop.f32.mrb[0].mxu0
        %v563 = vadd.f32 %v388, %v562
        %v564 = vpop.f32.mrb[0].mxu0
        %v565 = vadd.f32 %v392, %v564
        %v566 = vpop.f32.mrb[0].mxu0
        %v567 = vadd.f32 %v388, %v566
        %v568 = vpop.f32.mrb[0].mxu0
        %v569 = vadd.f32 %v392, %v568
        %570 = vmatprep.mubr.bf16.mxu0 0
        %571 = vmatmul.mubr.bf16.gmra.mrb[0].mxu0 %v350
        %v572 = vpop.f32.mrb[0].mxu0
        %v573 = vadd.f32 %v388, %v572
        %v574 = vpop.f32.mrb[0].mxu0
        %v575 = vadd.f32 %v392, %v574
        %v576 = vpop.f32.mrb[0].mxu0
        %v577 = vadd.f32 %v388, %v576
        %v578 = vpop.f32.mrb[0].mxu0
        %v579 = vadd.f32 %v392, %v578
        %580 = vdwg.mxu0
        %581 = vmatprep.subr.bf16.mxu0 0
        %582 = vmatpush1.bf16.msra.mxu0 %v482
        %583 = vmatprep.subr.bf16.mxu0 0
        %584 = vmatpush1.bf16.msra.mxu0 %v485
        %585 = vmatprep.subr.bf16.mxu0 0
        %586 = vmatpush1.bf16.msra.mxu0 %v488
        %587 = vmatprep.subr.bf16.mxu0 0
        %588 = vmatpush1.bf16.msra.mxu0 %v491
        %589 = vmatprep.subr.bf16.mxu0 0
        %590 = vmatpush1.bf16.msra.mxu0 %v494
        %591 = vmatprep.subr.bf16.mxu0 0
        %592 = vmatpush1.bf16.msra.mxu0 %v497
        %593 = vmatprep.subr.bf16.mxu0 0
        %594 = vmatpush1.bf16.msra.mxu0 %v500
        %595 = vmatprep.subr.bf16.mxu0 0
        %596 = vmatpush1.bf16.msra.mxu0 %v503
        %597 = vmatprep.subr.bf16.mxu0 0
        %598 = vmatpush1.bf16.msra.mxu0 0
        %599 = vmatprep.subr.bf16.mxu0 0
        %600 = vmatpush1.bf16.msra.mxu0 0
        %601 = vmatprep.subr.bf16.mxu0 0
        %602 = vmatpush1.bf16.msra.mxu0 0
        %603 = vmatprep.subr.bf16.mxu0 0
        %604 = vmatpush1.bf16.msra.mxu0 0
        %605 = vmatprep.subr.bf16.mxu0 0
        %606 = vmatpush1.bf16.msra.mxu0 0
        %607 = vmatprep.subr.bf16.mxu0 0
        %608 = vmatpush1.bf16.msra.mxu0 0
        %609 = vmatprep.subr.bf16.mxu0 0
        %610 = vmatpush1.bf16.msra.mxu0 0
        %611 = vmatprep.subr.bf16.mxu0 0
        %612 = vmatpush1.bf16.msra.mxu0 0
        %613 = vmatprep.mubr.bf16.mxu0 0
        %614 = vmatmul.mubr.bf16.gmra.mrb[0].mxu0 %v349
        %v615 = vpop.f32.mrb[0].mxu0
        %v616 = vadd.f32 %v396, %v615
        %v617 = vpop.f32.mrb[0].mxu0
        %v618 = vpop.f32.mrb[0].mxu0
        %v619 = vadd.f32 %v396, %v618
        %v620 = vpop.f32.mrb[0].mxu0
        %621 = vmatprep.mubr.bf16.mxu0 0
        %622 = vmatmul.mubr.bf16.gmra.mrb[0].mxu0 %v350
        %v623 = vpop.f32.mrb[0].mxu0
        %v624 = vadd.f32 %v396, %v623
        %v625 = vpop.f32.mrb[0].mxu0
        %v626 = vpop.f32.mrb[0].mxu0
        %v627 = vadd.f32 %v396, %v626
        %v628 = vpop.f32.mrb[0].mxu0
        %629 = vdwg.mxu0
        %630 = vst [vmem:[#allocation3] sm:$0xff] %v563
        %631 = vst [vmem:[#allocation3 + $0x8] sm:$0xff] %v565
        %632 = vst [vmem:[#allocation3 + $0x10] sm:$0xff] %v616
        %633 = vst [vmem:[#allocation3 + $0x18] sm:$0xff] %v567
        %634 = vst [vmem:[#allocation3 + $0x20] sm:$0xff] %v569
        %635 = vst [vmem:[#allocation3 + $0x28] sm:$0xff] %v619
        %636 = vst [vmem:[#allocation3 + $0x30] sm:$0xff] %v573
        %637 = vst [vmem:[#allocation3 + $0x38] sm:$0xff] %v575
        %638 = vst [vmem:[#allocation3 + $0x40] sm:$0xff] %v624
        %639 = vst [vmem:[#allocation3 + $0x48] sm:$0xff] %v577
        %640 = vst [vmem:[#allocation3 + $0x50] sm:$0xff] %v579
        %641 = vst [vmem:[#allocation3 + $0x58] sm:$0xff] %v627
        %v642 = vld [vmem:[%s5] sm:$0x1]
        %v644 = vlaneseq
        %v645 = vshrl.u32 %v644, 7
        %v646 = vsub.s32 0, %v645
        %v647 = vrot.slane %v642, %v646
        %v649 = vld [vmem:[#allocation2] sm:$0xff]
        %v650 = vld [vmem:[#allocation3] sm:$0xff]
        %v651 = vld [vmem:[#allocation3 + $0x8] sm:$0xff]
        %v652 = vld [vmem:[#allocation3 + $0x10] sm:$0xff]
        %v653 = vpack.c.bf16 %v649, %v649
        %v654 = vld [vmem:[#allocation10] sm:$0xff]
        %v655 = vld [vmem:[#allocation10 + $0x8] sm:$0xf]
        %v656 = vld [vmem:[#allocation10 + $0xc] sm:$0xff]
        %v657 = vld [vmem:[#allocation10 + $0x14] sm:$0xf]
        %v658 = vld [vmem:[#allocation10 + $0x18] sm:$0xff]
        %v659 = vld [vmem:[#allocation10 + $0x20] sm:$0xf]
        %v660 = vld [vmem:[#allocation10 + $0x24] sm:$0xff]
        %v661 = vld [vmem:[#allocation10 + $0x2c] sm:$0xf]
        %v662 = vld [vmem:[#allocation10 + $0x30] sm:$0xff]
        %v663 = vld [vmem:[#allocation10 + $0x38] sm:$0xf]
        %v664 = vld [vmem:[#allocation10 + $0x3c] sm:$0xff]
        %v665 = vld [vmem:[#allocation10 + $0x44] sm:$0xf]
        %v666 = vld [vmem:[#allocation10 + $0x48] sm:$0xff]
        %v667 = vld [vmem:[#allocation10 + $0x50] sm:$0xf]
        %v668 = vld [vmem:[#allocation10 + $0x54] sm:$0xff]
        %v669 = vld [vmem:[#allocation10 + $0x5c] sm:$0xf]
        %v670 = vld [vmem:[#allocation10 + $0x60] sm:$0xff]
        %v671 = vld [vmem:[#allocation10 + $0x68] sm:$0xf]
        %v672 = vld [vmem:[#allocation10 + $0x6c] sm:$0xff]
        %v673 = vld [vmem:[#allocation10 + $0x74] sm:$0xf]
        %v674 = vld [vmem:[#allocation10 + $0x78] sm:$0xff]
        %v675 = vld [vmem:[#allocation10 + $0x80] sm:$0xf]
        %v676 = vld [vmem:[#allocation10 + $0x84] sm:$0xff]
        %v677 = vld [vmem:[#allocation10 + $0x8c] sm:$0xf]
        %v678 = vld [vmem:[#allocation10 + $0x90] sm:$0xff]
        %v679 = vld [vmem:[#allocation10 + $0x98] sm:$0xf]
        %v680 = vld [vmem:[#allocation10 + $0x9c] sm:$0xff]
        %v681 = vld [vmem:[#allocation10 + $0xa4] sm:$0xf]
        %v682 = vld [vmem:[#allocation10 + $0xa8] sm:$0xff]
        %v683 = vld [vmem:[#allocation10 + $0xb0] sm:$0xf]
        %v684 = vld [vmem:[#allocation10 + $0xb4] sm:$0xff]
        %v685 = vld [vmem:[#allocation10 + $0xbc] sm:$0xf]
        %v718 = vunpack.c.l.b16 %v654
        %v719 = vunpack.c.h.b16 %v654
        %v720 = vunpack.c.l.b16 %v655
        %v721 = vunpack.c.l.b16 %v656
        %v722 = vunpack.c.h.b16 %v656
        %v723 = vunpack.c.l.b16 %v657
        %v724 = vunpack.c.l.b16 %v658
        %v725 = vunpack.c.h.b16 %v658
        %v726 = vunpack.c.l.b16 %v659
        %v727 = vunpack.c.l.b16 %v660
        %v728 = vunpack.c.h.b16 %v660
        %v729 = vunpack.c.l.b16 %v661
        %v730 = vunpack.c.l.b16 %v662
        %v731 = vunpack.c.h.b16 %v662
        %v732 = vunpack.c.l.b16 %v663
        %v733 = vunpack.c.l.b16 %v664
        %v734 = vunpack.c.h.b16 %v664
        %v735 = vunpack.c.l.b16 %v665
        %v736 = vunpack.c.l.b16 %v666
        %v737 = vunpack.c.h.b16 %v666
        %v738 = vunpack.c.l.b16 %v667
        %v739 = vunpack.c.l.b16 %v668
        %v740 = vunpack.c.h.b16 %v668
        %v741 = vunpack.c.l.b16 %v669
        %v742 = vunpack.c.l.b16 %v670
        %v743 = vunpack.c.h.b16 %v670
        %v744 = vunpack.c.l.b16 %v671
        %v745 = vunpack.c.l.b16 %v672
        %v746 = vunpack.c.h.b16 %v672
        %v747 = vunpack.c.l.b16 %v673
        %v748 = vunpack.c.l.b16 %v674
        %v749 = vunpack.c.h.b16 %v674
        %v750 = vunpack.c.l.b16 %v675
        %v751 = vunpack.c.l.b16 %v676
        %v752 = vunpack.c.h.b16 %v676
        %v753 = vunpack.c.l.b16 %v677
        %v754 = vunpack.c.l.b16 %v678
        %v755 = vunpack.c.h.b16 %v678
        %v756 = vunpack.c.l.b16 %v679
        %v757 = vunpack.c.l.b16 %v680
        %v758 = vunpack.c.h.b16 %v680
        %v759 = vunpack.c.l.b16 %v681
        %v760 = vunpack.c.l.b16 %v682
        %v761 = vunpack.c.h.b16 %v682
        %v762 = vunpack.c.l.b16 %v683
        %v763 = vunpack.c.l.b16 %v684
        %v764 = vunpack.c.h.b16 %v684
        %v765 = vunpack.c.l.b16 %v685
        %v766 = vpack.c.b16 %v721, %v718
        %v767 = vpack.c.b16 %v722, %v719
        %v768 = vpack.c.b16 %v723, %v720
        %v769 = vpack.c.b16 %v727, %v724
        %v770 = vpack.c.b16 %v728, %v725
        %v771 = vpack.c.b16 %v729, %v726
        %v772 = vpack.c.b16 %v733, %v730
        %v773 = vpack.c.b16 %v734, %v731
        %v774 = vpack.c.b16 %v735, %v732
        %v775 = vpack.c.b16 %v739, %v736
        %v776 = vpack.c.b16 %v740, %v737
        %v777 = vpack.c.b16 %v741, %v738
        %v778 = vpack.c.b16 %v745, %v742
        %v779 = vpack.c.b16 %v746, %v743
        %v780 = vpack.c.b16 %v747, %v744
        %v781 = vpack.c.b16 %v751, %v748
        %v782 = vpack.c.b16 %v752, %v749
        %v783 = vpack.c.b16 %v753, %v750
        %v784 = vpack.c.b16 %v757, %v754
        %v785 = vpack.c.b16 %v758, %v755
        %v786 = vpack.c.b16 %v759, %v756
        %v787 = vpack.c.b16 %v763, %v760
        %v788 = vpack.c.b16 %v764, %v761
        %v789 = vpack.c.b16 %v765, %v762
        %814 = vmatprep.subr.bf16.mxu0 %v767
        %815 = vmatpush1.bf16.msra.mxu0 %v766
        %816 = vmatprep.subr.bf16.mxu0 %v770
        %817 = vmatpush1.bf16.msra.mxu0 %v769
        %818 = vmatprep.subr.bf16.mxu0 %v773
        %819 = vmatpush1.bf16.msra.mxu0 %v772
        %820 = vmatprep.subr.bf16.mxu0 %v776
        %821 = vmatpush1.bf16.msra.mxu0 %v775
        %822 = vmatprep.subr.bf16.mxu0 %v779
        %823 = vmatpush1.bf16.msra.mxu0 %v778
        %824 = vmatprep.subr.bf16.mxu0 %v782
        %825 = vmatpush1.bf16.msra.mxu0 %v781
        %826 = vmatprep.subr.bf16.mxu0 %v785
        %827 = vmatpush1.bf16.msra.mxu0 %v784
        %828 = vmatprep.subr.bf16.mxu0 %v788
        %829 = vmatpush1.bf16.msra.mxu0 %v787
        %830 = vmatprep.subr.bf16.mxu0 0
        %831 = vmatpush1.bf16.msra.mxu0 0
        %832 = vmatprep.subr.bf16.mxu0 0
        %833 = vmatpush1.bf16.msra.mxu0 0
        %834 = vmatprep.subr.bf16.mxu0 0
        %835 = vmatpush1.bf16.msra.mxu0 0
        %836 = vmatprep.subr.bf16.mxu0 0
        %837 = vmatpush1.bf16.msra.mxu0 0
        %838 = vmatprep.subr.bf16.mxu0 0
        %839 = vmatpush1.bf16.msra.mxu0 0
        %840 = vmatprep.subr.bf16.mxu0 0
        %841 = vmatpush1.bf16.msra.mxu0 0
        %842 = vmatprep.subr.bf16.mxu0 0
        %843 = vmatpush1.bf16.msra.mxu0 0
        %844 = vmatprep.subr.bf16.mxu0 0
        %845 = vmatpush1.bf16.msra.mxu0 0
        %846 = vmatprep.mubr.bf16.mxu0 0
        %847 = vmatmul.mubr.bf16.gmra.mrb[0].mxu0 %v653
        %v848 = vpop.f32.mrb[0].mxu0
        %v849 = vadd.f32 0.0, %v848
        %v850 = vpop.f32.mrb[0].mxu0
        %v851 = vadd.f32 0.0, %v850
        %v852 = vpop.f32.mrb[0].mxu0
        %v853 = vpop.f32.mrb[0].mxu0
        %854 = vdwg.mxu0
        %855 = vmatprep.subr.bf16.mxu0 0
        %856 = vmatpush1.bf16.msra.mxu0 %v768
        %857 = vmatprep.subr.bf16.mxu0 0
        %858 = vmatpush1.bf16.msra.mxu0 %v771
        %859 = vmatprep.subr.bf16.mxu0 0
        %860 = vmatpush1.bf16.msra.mxu0 %v774
        %861 = vmatprep.subr.bf16.mxu0 0
        %862 = vmatpush1.bf16.msra.mxu0 %v777
        %863 = vmatprep.subr.bf16.mxu0 0
        %864 = vmatpush1.bf16.msra.mxu0 %v780
        %865 = vmatprep.subr.bf16.mxu0 0
        %866 = vmatpush1.bf16.msra.mxu0 %v783
        %867 = vmatprep.subr.bf16.mxu0 0
        %868 = vmatpush1.bf16.msra.mxu0 %v786
        %869 = vmatprep.subr.bf16.mxu0 0
        %870 = vmatpush1.bf16.msra.mxu0 %v789
        %871 = vmatprep.subr.bf16.mxu0 0
        %872 = vmatpush1.bf16.msra.mxu0 0
        %873 = vmatprep.subr.bf16.mxu0 0
        %874 = vmatpush1.bf16.msra.mxu0 0
        %875 = vmatprep.subr.bf16.mxu0 0
        %876 = vmatpush1.bf16.msra.mxu0 0
        %877 = vmatprep.subr.bf16.mxu0 0
        %878 = vmatpush1.bf16.msra.mxu0 0
        %879 = vmatprep.subr.bf16.mxu0 0
        %880 = vmatpush1.bf16.msra.mxu0 0
        %881 = vmatprep.subr.bf16.mxu0 0
        %882 = vmatpush1.bf16.msra.mxu0 0
        %883 = vmatprep.subr.bf16.mxu0 0
        %884 = vmatpush1.bf16.msra.mxu0 0
        %885 = vmatprep.subr.bf16.mxu0 0
        %886 = vmatpush1.bf16.msra.mxu0 0
        %887 = vmatprep.mubr.bf16.mxu0 0
        %888 = vmatmul.mubr.bf16.gmra.mrb[0].mxu0 %v653
        %v889 = vpop.f32.mrb[0].mxu0
        %v890 = vadd.f32 0.0, %v889
        %v891 = vpop.f32.mrb[0].mxu0
        %v892 = vpop.f32.mrb[0].mxu0
        %v893 = vpop.f32.mrb[0].mxu0
        %894 = vdwg.mxu0
        %v895 = vadd.f32 %v650, %v849
        %v896 = vxor.u32 %v895, 2147483648
        %v897 = vmul.f32 %v896, 1.442695
        %v898 = vpow.pop %v897
        %v899 = vadd.f32 %v898, 1.0
        %v900 = vrcp.pop %v899
        %v901 = vmul.f32 1.0, %v900
        %v902 = vadd.f32 %v651, %v851
        %v903 = vxor.u32 %v902, 2147483648
        %v904 = vmul.f32 %v903, 1.442695
        %v905 = vpow.pop %v904
        %v906 = vadd.f32 %v905, 1.0
        %v907 = vrcp.pop %v906
        %v908 = vmul.f32 1.0, %v907
        %v909 = vadd.f32 %v890, %v647
        %v910 = vmul.f32 %v901, %v909
        %v911 = vadd.f32 %v652, %v910
        %v912 = vtanh.pop %v911
        %v913 = vsub.f32 1.0, %v908
        %v914 = vmul.f32 %v913, %v912
        %v915 = vmul.f32 %v908, %v649
        %v916 = vadd.f32 %v914, %v915
        %917 = vst [vmem:[%s335] sm:$0xff] %v916
        %s918 = scalar_lea.vmem [#allocation3], 24
        %v919 = vld [vmem:[%s918] sm:$0xff]
        %v920 = vld [vmem:[%s918 + $0x8] sm:$0xff]
        %v921 = vld [vmem:[%s918 + $0x10] sm:$0xff]
        %v922 = vpack.c.bf16 %v916, %v916
        %v923 = vld [vmem:[#allocation10] sm:$0xff]
        %v924 = vld [vmem:[#allocation10 + $0x8] sm:$0xf]
        %v925 = vld [vmem:[#allocation10 + $0xc] sm:$0xff]
        %v926 = vld [vmem:[#allocation10 + $0x14] sm:$0xf]
        %v927 = vld [vmem:[#allocation10 + $0x18] sm:$0xff]
        %v928 = vld [vmem:[#allocation10 + $0x20] sm:$0xf]
        %v929 = vld [vmem:[#allocation10 + $0x24] sm:$0xff]
        %v930 = vld [vmem:[#allocation10 + $0x2c] sm:$0xf]
        %v931 = vld [vmem:[#allocation10 + $0x30] sm:$0xff]
        %v932 = vld [vmem:[#allocation10 + $0x38] sm:$0xf]
        %v933 = vld [vmem:[#allocation10 + $0x3c] sm:$0xff]
        %v934 = vld [vmem:[#allocation10 + $0x44] sm:$0xf]
        %v935 = vld [vmem:[#allocation10 + $0x48] sm:$0xff]
        %v936 = vld [vmem:[#allocation10 + $0x50] sm:$0xf]
        %v937 = vld [vmem:[#allocation10 + $0x54] sm:$0xff]
        %v938 = vld [vmem:[#allocation10 + $0x5c] sm:$0xf]
        %v939 = vld [vmem:[#allocation10 + $0x60] sm:$0xff]
        %v940 = vld [vmem:[#allocation10 + $0x68] sm:$0xf]
        %v941 = vld [vmem:[#allocation10 + $0x6c] sm:$0xff]
        %v942 = vld [vmem:[#allocation10 + $0x74] sm:$0xf]
        %v943 = vld [vmem:[#allocation10 + $0x78] sm:$0xff]
        %v944 = vld [vmem:[#allocation10 + $0x80] sm:$0xf]
        %v945 = vld [vmem:[#allocation10 + $0x84] sm:$0xff]
        %v946 = vld [vmem:[#allocation10 + $0x8c] sm:$0xf]
        %v947 = vld [vmem:[#allocation10 + $0x90] sm:$0xff]
        %v948 = vld [vmem:[#allocation10 + $0x98] sm:$0xf]
        %v949 = vld [vmem:[#allocation10 + $0x9c] sm:$0xff]
        %v950 = vld [vmem:[#allocation10 + $0xa4] sm:$0xf]
        %v951 = vld [vmem:[#allocation10 + $0xa8] sm:$0xff]
        %v952 = vld [vmem:[#allocation10 + $0xb0] sm:$0xf]
        %v953 = vld [vmem:[#allocation10 + $0xb4] sm:$0xff]
        %v954 = vld [vmem:[#allocation10 + $0xbc] sm:$0xf]
        %v987 = vunpack.c.l.b16 %v923
        %v988 = vunpack.c.h.b16 %v923
        %v989 = vunpack.c.l.b16 %v924
        %v990 = vunpack.c.l.b16 %v925
        %v991 = vunpack.c.h.b16 %v925
        %v992 = vunpack.c.l.b16 %v926
        %v993 = vunpack.c.l.b16 %v927
        %v994 = vunpack.c.h.b16 %v927
        %v995 = vunpack.c.l.b16 %v928
        %v996 = vunpack.c.l.b16 %v929
        %v997 = vunpack.c.h.b16 %v929
        %v998 = vunpack.c.l.b16 %v930
        %v999 = vunpack.c.l.b16 %v931
        %v1000 = vunpack.c.h.b16 %v931
        %v1001 = vunpack.c.l.b16 %v932
        %v1002 = vunpack.c.l.b16 %v933
        %v1003 = vunpack.c.h.b16 %v933
        %v1004 = vunpack.c.l.b16 %v934
        %v1005 = vunpack.c.l.b16 %v935
        %v1006 = vunpack.c.h.b16 %v935
        %v1007 = vunpack.c.l.b16 %v936
        %v1008 = vunpack.c.l.b16 %v937
        %v1009 = vunpack.c.h.b16 %v937
        %v1010 = vunpack.c.l.b16 %v938
        %v1011 = vunpack.c.l.b16 %v939
        %v1012 = vunpack.c.h.b16 %v939
        %v1013 = vunpack.c.l.b16 %v940
        %v1014 = vunpack.c.l.b16 %v941
        %v1015 = vunpack.c.h.b16 %v941
        %v1016 = vunpack.c.l.b16 %v942
        %v1017 = vunpack.c.l.b16 %v943
        %v1018 = vunpack.c.h.b16 %v943
        %v1019 = vunpack.c.l.b16 %v944
        %v1020 = vunpack.c.l.b16 %v945
        %v1021 = vunpack.c.h.b16 %v945
        %v1022 = vunpack.c.l.b16 %v946
        %v1023 = vunpack.c.l.b16 %v947
        %v1024 = vunpack.c.h.b16 %v947
        %v1025 = vunpack.c.l.b16 %v948
        %v1026 = vunpack.c.l.b16 %v949
        %v1027 = vunpack.c.h.b16 %v949
        %v1028 = vunpack.c.l.b16 %v950
        %v1029 = vunpack.c.l.b16 %v951
        %v1030 = vunpack.c.h.b16 %v951
        %v1031 = vunpack.c.l.b16 %v952
        %v1032 = vunpack.c.l.b16 %v953
        %v1033 = vunpack.c.h.b16 %v953
        %v1034 = vunpack.c.l.b16 %v954
        %v1035 = vpack.c.b16 %v990, %v987
        %v1036 = vpack.c.b16 %v991, %v988
        %v1037 = vpack.c.b16 %v992, %v989
        %v1038 = vpack.c.b16 %v996, %v993
        %v1039 = vpack.c.b16 %v997, %v994
        %v1040 = vpack.c.b16 %v998, %v995
        %v1041 = vpack.c.b16 %v1002, %v999
        %v1042 = vpack.c.b16 %v1003, %v1000
        %v1043 = vpack.c.b16 %v1004, %v1001
        %v1044 = vpack.c.b16 %v1008, %v1005
        %v1045 = vpack.c.b16 %v1009, %v1006
        %v1046 = vpack.c.b16 %v1010, %v1007
        %v1047 = vpack.c.b16 %v1014, %v1011
        %v1048 = vpack.c.b16 %v1015, %v1012
        %v1049 = vpack.c.b16 %v1016, %v1013
        %v1050 = vpack.c.b16 %v1020, %v1017
        %v1051 = vpack.c.b16 %v1021, %v1018
        %v1052 = vpack.c.b16 %v1022, %v1019
        %v1053 = vpack.c.b16 %v1026, %v1023
        %v1054 = vpack.c.b16 %v1027, %v1024
        %v1055 = vpack.c.b16 %v1028, %v1025
        %v1056 = vpack.c.b16 %v1032, %v1029
        %v1057 = vpack.c.b16 %v1033, %v1030
        %v1058 = vpack.c.b16 %v1034, %v1031
        %1083 = vmatprep.subr.bf16.mxu0 %v1036
        %1084 = vmatpush1.bf16.msra.mxu0 %v1035
        %1085 = vmatprep.subr.bf16.mxu0 %v1039
        %1086 = vmatpush1.bf16.msra.mxu0 %v1038
        %1087 = vmatprep.subr.bf16.mxu0 %v1042
        %1088 = vmatpush1.bf16.msra.mxu0 %v1041
        %1089 = vmatprep.subr.bf16.mxu0 %v1045
        %1090 = vmatpush1.bf16.msra.mxu0 %v1044
        %1091 = vmatprep.subr.bf16.mxu0 %v1048
        %1092 = vmatpush1.bf16.msra.mxu0 %v1047
        %1093 = vmatprep.subr.bf16.mxu0 %v1051
        %1094 = vmatpush1.bf16.msra.mxu0 %v1050
        %1095 = vmatprep.subr.bf16.mxu0 %v1054
        %1096 = vmatpush1.bf16.msra.mxu0 %v1053
        %1097 = vmatprep.subr.bf16.mxu0 %v1057
        %1098 = vmatpush1.bf16.msra.mxu0 %v1056
        %1099 = vmatprep.subr.bf16.mxu0 0
        %1100 = vmatpush1.bf16.msra.mxu0 0
        %1101 = vmatprep.subr.bf16.mxu0 0
        %1102 = vmatpush1.bf16.msra.mxu0 0
        %1103 = vmatprep.subr.bf16.mxu0 0
        %1104 = vmatpush1.bf16.msra.mxu0 0
        %1105 = vmatprep.subr.bf16.mxu0 0
        %1106 = vmatpush1.bf16.msra.mxu0 0
        %1107 = vmatprep.subr.bf16.mxu0 0
        %1108 = vmatpush1.bf16.msra.mxu0 0
        %1109 = vmatprep.subr.bf16.mxu0 0
        %1110 = vmatpush1.bf16.msra.mxu0 0
        %1111 = vmatprep.subr.bf16.mxu0 0
        %1112 = vmatpush1.bf16.msra.mxu0 0
        %1113 = vmatprep.subr.bf16.mxu0 0
        %1114 = vmatpush1.bf16.msra.mxu0 0
        %1115 = vmatprep.mubr.bf16.mxu0 0
        %1116 = vmatmul.mubr.bf16.gmra.mrb[0].mxu0 %v922
        %v1117 = vpop.f32.mrb[0].mxu0
        %v1118 = vadd.f32 0.0, %v1117
        %v1119 = vpop.f32.mrb[0].mxu0
        %v1120 = vadd.f32 0.0, %v1119
        %v1121 = vpop.f32.mrb[0].mxu0
        %v1122 = vpop.f32.mrb[0].mxu0
        %1123 = vdwg.mxu0
        %1124 = vmatprep.subr.bf16.mxu0 0
        %1125 = vmatpush1.bf16.msra.mxu0 %v1037
        %1126 = vmatprep.subr.bf16.mxu0 0
        %1127 = vmatpush1.bf16.msra.mxu0 %v1040
        %1128 = vmatprep.subr.bf16.mxu0 0
        %1129 = vmatpush1.bf16.msra.mxu0 %v1043
        %1130 = vmatprep.subr.bf16.mxu0 0
        %1131 = vmatpush1.bf16.msra.mxu0 %v1046
        %1132 = vmatprep.subr.bf16.mxu0 0
        %1133 = vmatpush1.bf16.msra.mxu0 %v1049
        %1134 = vmatprep.subr.bf16.mxu0 0
        %1135 = vmatpush1.bf16.msra.mxu0 %v1052
        %1136 = vmatprep.subr.bf16.mxu0 0
        %1137 = vmatpush1.bf16.msra.mxu0 %v1055
        %1138 = vmatprep.subr.bf16.mxu0 0
        %1139 = vmatpush1.bf16.msra.mxu0 %v1058
        %1140 = vmatprep.subr.bf16.mxu0 0
        %1141 = vmatpush1.bf16.msra.mxu0 0
        %1142 = vmatprep.subr.bf16.mxu0 0
        %1143 = vmatpush1.bf16.msra.mxu0 0
        %1144 = vmatprep.subr.bf16.mxu0 0
        %1145 = vmatpush1.bf16.msra.mxu0 0
        %1146 = vmatprep.subr.bf16.mxu0 0
        %1147 = vmatpush1.bf16.msra.mxu0 0
        %1148 = vmatprep.subr.bf16.mxu0 0
        %1149 = vmatpush1.bf16.msra.mxu0 0
        %1150 = vmatprep.subr.bf16.mxu0 0
        %1151 = vmatpush1.bf16.msra.mxu0 0
        %1152 = vmatprep.subr.bf16.mxu0 0
        %1153 = vmatpush1.bf16.msra.mxu0 0
        %1154 = vmatprep.subr.bf16.mxu0 0
        %1155 = vmatpush1.bf16.msra.mxu0 0
        %1156 = vmatprep.mubr.bf16.mxu0 0
        %1157 = vmatmul.mubr.bf16.gmra.mrb[0].mxu0 %v922
        %v1158 = vpop.f32.mrb[0].mxu0
        %v1159 = vadd.f32 0.0, %v1158
        %v1160 = vpop.f32.mrb[0].mxu0
        %v1161 = vpop.f32.mrb[0].mxu0
        %v1162 = vpop.f32.mrb[0].mxu0
        %1163 = vdwg.mxu0
        %v1164 = vadd.f32 %v919, %v1118
        %v1165 = vxor.u32 %v1164, 2147483648
        %v1166 = vmul.f32 %v1165, 1.442695
        %v1167 = vpow.pop %v1166
        %v1168 = vadd.f32 %v1167, 1.0
        %v1169 = vrcp.pop %v1168
        %v1170 = vmul.f32 1.0, %v1169
        %v1171 = vadd.f32 %v920, %v1120
        %v1172 = vxor.u32 %v1171, 2147483648
        %v1173 = vmul.f32 %v1172, 1.442695
        %v1174 = vpow.pop %v1173
        %v1175 = vadd.f32 %v1174, 1.0
        %v1176 = vrcp.pop %v1175
        %v1177 = vmul.f32 1.0, %v1176
        %v1178 = vadd.f32 %v1159, %v647
        %v1179 = vmul.f32 %v1170, %v1178
        %v1180 = vadd.f32 %v921, %v1179
        %v1181 = vtanh.pop %v1180
        %v1182 = vsub.f32 1.0, %v1177
        %v1183 = vmul.f32 %v1182, %v1181
        %v1184 = vmul.f32 %v1177, %v916
        %v1185 = vadd.f32 %v1183, %v1184
        %s1186 = scalar_lea.vmem %s335, 8 [#allocation12]
        %1187 = vst [vmem:[%s1186] sm:$0xff] %v1185
        %s1188 = scalar_lea.vmem [#allocation3], 48
        %v1189 = vld [vmem:[%s1188] sm:$0xff]
        %v1190 = vld [vmem:[%s1188 + $0x8] sm:$0xff]
        %v1191 = vld [vmem:[%s1188 + $0x10] sm:$0xff]
        %v1192 = vpack.c.bf16 %v1185, %v1185
        %v1193 = vld [vmem:[#allocation10] sm:$0xff]
        %v1194 = vld [vmem:[#allocation10 + $0x8] sm:$0xf]
        %v1195 = vld [vmem:[#allocation10 + $0xc] sm:$0xff]
        %v1196 = vld [vmem:[#allocation10 + $0x14] sm:$0xf]
        %v1197 = vld [vmem:[#allocation10 + $0x18] sm:$0xff]
        %v1198 = vld [vmem:[#allocation10 + $0x20] sm:$0xf]
        %v1199 = vld [vmem:[#allocation10 + $0x24] sm:$0xff]
        %v1200 = vld [vmem:[#allocation10 + $0x2c] sm:$0xf]
        %v1201 = vld [vmem:[#allocation10 + $0x30] sm:$0xff]
        %v1202 = vld [vmem:[#allocation10 + $0x38] sm:$0xf]
        %v1203 = vld [vmem:[#allocation10 + $0x3c] sm:$0xff]
        %v1204 = vld [vmem:[#allocation10 + $0x44] sm:$0xf]
        %v1205 = vld [vmem:[#allocation10 + $0x48] sm:$0xff]
        %v1206 = vld [vmem:[#allocation10 + $0x50] sm:$0xf]
        %v1207 = vld [vmem:[#allocation10 + $0x54] sm:$0xff]
        %v1208 = vld [vmem:[#allocation10 + $0x5c] sm:$0xf]
        %v1209 = vld [vmem:[#allocation10 + $0x60] sm:$0xff]
        %v1210 = vld [vmem:[#allocation10 + $0x68] sm:$0xf]
        %v1211 = vld [vmem:[#allocation10 + $0x6c] sm:$0xff]
        %v1212 = vld [vmem:[#allocation10 + $0x74] sm:$0xf]
        %v1213 = vld [vmem:[#allocation10 + $0x78] sm:$0xff]
        %v1214 = vld [vmem:[#allocation10 + $0x80] sm:$0xf]
        %v1215 = vld [vmem:[#allocation10 + $0x84] sm:$0xff]
        %v1216 = vld [vmem:[#allocation10 + $0x8c] sm:$0xf]
        %v1217 = vld [vmem:[#allocation10 + $0x90] sm:$0xff]
        %v1218 = vld [vmem:[#allocation10 + $0x98] sm:$0xf]
        %v1219 = vld [vmem:[#allocation10 + $0x9c] sm:$0xff]
        %v1220 = vld [vmem:[#allocation10 + $0xa4] sm:$0xf]
        %v1221 = vld [vmem:[#allocation10 + $0xa8] sm:$0xff]
        %v1222 = vld [vmem:[#allocation10 + $0xb0] sm:$0xf]
        %v1223 = vld [vmem:[#allocation10 + $0xb4] sm:$0xff]
        %v1224 = vld [vmem:[#allocation10 + $0xbc] sm:$0xf]
        %v1257 = vunpack.c.l.b16 %v1193
        %v1258 = vunpack.c.h.b16 %v1193
        %v1259 = vunpack.c.l.b16 %v1194
        %v1260 = vunpack.c.l.b16 %v1195
        %v1261 = vunpack.c.h.b16 %v1195
        %v1262 = vunpack.c.l.b16 %v1196
        %v1263 = vunpack.c.l.b16 %v1197
        %v1264 = vunpack.c.h.b16 %v1197
        %v1265 = vunpack.c.l.b16 %v1198
        %v1266 = vunpack.c.l.b16 %v1199
        %v1267 = vunpack.c.h.b16 %v1199
        %v1268 = vunpack.c.l.b16 %v1200
        %v1269 = vunpack.c.l.b16 %v1201
        %v1270 = vunpack.c.h.b16 %v1201
        %v1271 = vunpack.c.l.b16 %v1202
        %v1272 = vunpack.c.l.b16 %v1203
        %v1273 = vunpack.c.h.b16 %v1203
        %v1274 = vunpack.c.l.b16 %v1204
        %v1275 = vunpack.c.l.b16 %v1205
        %v1276 = vunpack.c.h.b16 %v1205
        %v1277 = vunpack.c.l.b16 %v1206
        %v1278 = vunpack.c.l.b16 %v1207
        %v1279 = vunpack.c.h.b16 %v1207
        %v1280 = vunpack.c.l.b16 %v1208
        %v1281 = vunpack.c.l.b16 %v1209
        %v1282 = vunpack.c.h.b16 %v1209
        %v1283 = vunpack.c.l.b16 %v1210
        %v1284 = vunpack.c.l.b16 %v1211
        %v1285 = vunpack.c.h.b16 %v1211
        %v1286 = vunpack.c.l.b16 %v1212
        %v1287 = vunpack.c.l.b16 %v1213
        %v1288 = vunpack.c.h.b16 %v1213
        %v1289 = vunpack.c.l.b16 %v1214
        %v1290 = vunpack.c.l.b16 %v1215
        %v1291 = vunpack.c.h.b16 %v1215
        %v1292 = vunpack.c.l.b16 %v1216
        %v1293 = vunpack.c.l.b16 %v1217
        %v1294 = vunpack.c.h.b16 %v1217
        %v1295 = vunpack.c.l.b16 %v1218
        %v1296 = vunpack.c.l.b16 %v1219
        %v1297 = vunpack.c.h.b16 %v1219
        %v1298 = vunpack.c.l.b16 %v1220
        %v1299 = vunpack.c.l.b16 %v1221
        %v1300 = vunpack.c.h.b16 %v1221
        %v1301 = vunpack.c.l.b16 %v1222
        %v1302 = vunpack.c.l.b16 %v1223
        %v1303 = vunpack.c.h.b16 %v1223
        %v1304 = vunpack.c.l.b16 %v1224
        %v1305 = vpack.c.b16 %v1260, %v1257
        %v1306 = vpack.c.b16 %v1261, %v1258
        %v1307 = vpack.c.b16 %v1262, %v1259
        %v1308 = vpack.c.b16 %v1266, %v1263
        %v1309 = vpack.c.b16 %v1267, %v1264
        %v1310 = vpack.c.b16 %v1268, %v1265
        %v1311 = vpack.c.b16 %v1272, %v1269
        %v1312 = vpack.c.b16 %v1273, %v1270
        %v1313 = vpack.c.b16 %v1274, %v1271
        %v1314 = vpack.c.b16 %v1278, %v1275
        %v1315 = vpack.c.b16 %v1279, %v1276
        %v1316 = vpack.c.b16 %v1280, %v1277
        %v1317 = vpack.c.b16 %v1284, %v1281
        %v1318 = vpack.c.b16 %v1285, %v1282
        %v1319 = vpack.c.b16 %v1286, %v1283
        %v1320 = vpack.c.b16 %v1290, %v1287
        %v1321 = vpack.c.b16 %v1291, %v1288
        %v1322 = vpack.c.b16 %v1292, %v1289
        %v1323 = vpack.c.b16 %v1296, %v1293
        %v1324 = vpack.c.b16 %v1297, %v1294
        %v1325 = vpack.c.b16 %v1298, %v1295
        %v1326 = vpack.c.b16 %v1302, %v1299
        %v1327 = vpack.c.b16 %v1303, %v1300
        %v1328 = vpack.c.b16 %v1304, %v1301
        %1353 = vmatprep.subr.bf16.mxu0 %v1306
        %1354 = vmatpush1.bf16.msra.mxu0 %v1305
        %1355 = vmatprep.subr.bf16.mxu0 %v1309
        %1356 = vmatpush1.bf16.msra.mxu0 %v1308
        %1357 = vmatprep.subr.bf16.mxu0 %v1312
        %1358 = vmatpush1.bf16.msra.mxu0 %v1311
        %1359 = vmatprep.subr.bf16.mxu0 %v1315
        %1360 = vmatpush1.bf16.msra.mxu0 %v1314
        %1361 = vmatprep.subr.bf16.mxu0 %v1318
        %1362 = vmatpush1.bf16.msra.mxu0 %v1317
        %1363 = vmatprep.subr.bf16.mxu0 %v1321
        %1364 = vmatpush1.bf16.msra.mxu0 %v1320
        %1365 = vmatprep.subr.bf16.mxu0 %v1324
        %1366 = vmatpush1.bf16.msra.mxu0 %v1323
        %1367 = vmatprep.subr.bf16.mxu0 %v1327
        %1368 = vmatpush1.bf16.msra.mxu0 %v1326
        %1369 = vmatprep.subr.bf16.mxu0 0
        %1370 = vmatpush1.bf16.msra.mxu0 0
        %1371 = vmatprep.subr.bf16.mxu0 0
        %1372 = vmatpush1.bf16.msra.mxu0 0
        %1373 = vmatprep.subr.bf16.mxu0 0
        %1374 = vmatpush1.bf16.msra.mxu0 0
        %1375 = vmatprep.subr.bf16.mxu0 0
        %1376 = vmatpush1.bf16.msra.mxu0 0
        %1377 = vmatprep.subr.bf16.mxu0 0
        %1378 = vmatpush1.bf16.msra.mxu0 0
        %1379 = vmatprep.subr.bf16.mxu0 0
        %1380 = vmatpush1.bf16.msra.mxu0 0
        %1381 = vmatprep.subr.bf16.mxu0 0
        %1382 = vmatpush1.bf16.msra.mxu0 0
        %1383 = vmatprep.subr.bf16.mxu0 0
        %1384 = vmatpush1.bf16.msra.mxu0 0
        %1385 = vmatprep.mubr.bf16.mxu0 0
        %1386 = vmatmul.mubr.bf16.gmra.mrb[0].mxu0 %v1192
        %v1387 = vpop.f32.mrb[0].mxu0
        %v1388 = vadd.f32 0.0, %v1387
        %v1389 = vpop.f32.mrb[0].mxu0
        %v1390 = vadd.f32 0.0, %v1389
        %v1391 = vpop.f32.mrb[0].mxu0
        %v1392 = vpop.f32.mrb[0].mxu0
        %1393 = vdwg.mxu0
        %1394 = vmatprep.subr.bf16.mxu0 0
        %1395 = vmatpush1.bf16.msra.mxu0 %v1307
        %1396 = vmatprep.subr.bf16.mxu0 0
        %1397 = vmatpush1.bf16.msra.mxu0 %v1310
        %1398 = vmatprep.subr.bf16.mxu0 0
        %1399 = vmatpush1.bf16.msra.mxu0 %v1313
        %1400 = vmatprep.subr.bf16.mxu0 0
        %1401 = vmatpush1.bf16.msra.mxu0 %v1316
        %1402 = vmatprep.subr.bf16.mxu0 0
        %1403 = vmatpush1.bf16.msra.mxu0 %v1319
        %1404 = vmatprep.subr.bf16.mxu0 0
        %1405 = vmatpush1.bf16.msra.mxu0 %v1322
        %1406 = vmatprep.subr.bf16.mxu0 0
        %1407 = vmatpush1.bf16.msra.mxu0 %v1325
        %1408 = vmatprep.subr.bf16.mxu0 0
        %1409 = vmatpush1.bf16.msra.mxu0 %v1328
        %1410 = vmatprep.subr.bf16.mxu0 0
        %1411 = vmatpush1.bf16.msra.mxu0 0
        %1412 = vmatprep.subr.bf16.mxu0 0
        %1413 = vmatpush1.bf16.msra.mxu0 0
        %1414 = vmatprep.subr.bf16.mxu0 0
        %1415 = vmatpush1.bf16.msra.mxu0 0
        %1416 = vmatprep.subr.bf16.mxu0 0
        %1417 = vmatpush1.bf16.msra.mxu0 0
        %1418 = vmatprep.subr.bf16.mxu0 0
        %1419 = vmatpush1.bf16.msra.mxu0 0
        %1420 = vmatprep.subr.bf16.mxu0 0
        %1421 = vmatpush1.bf16.msra.mxu0 0
        %1422 = vmatprep.subr.bf16.mxu0 0
        %1423 = vmatpush1.bf16.msra.mxu0 0
        %1424 = vmatprep.subr.bf16.mxu0 0
        %1425 = vmatpush1.bf16.msra.mxu0 0
        %1426 = vmatprep.mubr.bf16.mxu0 0
        %1427 = vmatmul.mubr.bf16.gmra.mrb[0].mxu0 %v1192
        %v1428 = vpop.f32.mrb[0].mxu0
        %v1429 = vadd.f32 0.0, %v1428
        %v1430 = vpop.f32.mrb[0].mxu0
        %v1431 = vpop.f32.mrb[0].mxu0
        %v1432 = vpop.f32.mrb[0].mxu0
        %1433 = vdwg.mxu0
        %v1434 = vadd.f32 %v1189, %v1388
        %v1435 = vxor.u32 %v1434, 2147483648
        %v1436 = vmul.f32 %v1435, 1.442695
        %v1437 = vpow.pop %v1436
        %v1438 = vadd.f32 %v1437, 1.0
        %v1439 = vrcp.pop %v1438
        %v1440 = vmul.f32 1.0, %v1439
        %v1441 = vadd.f32 %v1190, %v1390
        %v1442 = vxor.u32 %v1441, 2147483648
        %v1443 = vmul.f32 %v1442, 1.442695
        %v1444 = vpow.pop %v1443
        %v1445 = vadd.f32 %v1444, 1.0
        %v1446 = vrcp.pop %v1445
        %v1447 = vmul.f32 1.0, %v1446
        %v1448 = vadd.f32 %v1429, %v647
        %v1449 = vmul.f32 %v1440, %v1448
        %v1450 = vadd.f32 %v1191, %v1449
        %v1451 = vtanh.pop %v1450
        %v1452 = vsub.f32 1.0, %v1447
        %v1453 = vmul.f32 %v1452, %v1451
        %v1454 = vmul.f32 %v1447, %v1185
        %v1455 = vadd.f32 %v1453, %v1454
        %s1456 = scalar_lea.vmem %s335, 16 [#allocation12]
        %1457 = vst [vmem:[%s1456] sm:$0xff] %v1455
        %s1458 = scalar_lea.vmem [#allocation3], 72
        %v1459 = vld [vmem:[%s1458] sm:$0xff]
        %v1460 = vld [vmem:[%s1458 + $0x8] sm:$0xff]
        %v1461 = vld [vmem:[%s1458 + $0x10] sm:$0xff]
        %v1462 = vpack.c.bf16 %v1455, %v1455
        %v1463 = vld [vmem:[#allocation10] sm:$0xff]
        %v1464 = vld [vmem:[#allocation10 + $0x8] sm:$0xf]
        %v1465 = vld [vmem:[#allocation10 + $0xc] sm:$0xff]
        %v1466 = vld [vmem:[#allocation10 + $0x14] sm:$0xf]
        %v1467 = vld [vmem:[#allocation10 + $0x18] sm:$0xff]
        %v1468 = vld [vmem:[#allocation10 + $0x20] sm:$0xf]
        %v1469 = vld [vmem:[#allocation10 + $0x24] sm:$0xff]
        %v1470 = vld [vmem:[#allocation10 + $0x2c] sm:$0xf]
        %v1471 = vld [vmem:[#allocation10 + $0x30] sm:$0xff]
        %v1472 = vld [vmem:[#allocation10 + $0x38] sm:$0xf]
        %v1473 = vld [vmem:[#allocation10 + $0x3c] sm:$0xff]
        %v1474 = vld [vmem:[#allocation10 + $0x44] sm:$0xf]
        %v1475 = vld [vmem:[#allocation10 + $0x48] sm:$0xff]
        %v1476 = vld [vmem:[#allocation10 + $0x50] sm:$0xf]
        %v1477 = vld [vmem:[#allocation10 + $0x54] sm:$0xff]
        %v1478 = vld [vmem:[#allocation10 + $0x5c] sm:$0xf]
        %v1479 = vld [vmem:[#allocation10 + $0x60] sm:$0xff]
        %v1480 = vld [vmem:[#allocation10 + $0x68] sm:$0xf]
        %v1481 = vld [vmem:[#allocation10 + $0x6c] sm:$0xff]
        %v1482 = vld [vmem:[#allocation10 + $0x74] sm:$0xf]
        %v1483 = vld [vmem:[#allocation10 + $0x78] sm:$0xff]
        %v1484 = vld [vmem:[#allocation10 + $0x80] sm:$0xf]
        %v1485 = vld [vmem:[#allocation10 + $0x84] sm:$0xff]
        %v1486 = vld [vmem:[#allocation10 + $0x8c] sm:$0xf]
        %v1487 = vld [vmem:[#allocation10 + $0x90] sm:$0xff]
        %v1488 = vld [vmem:[#allocation10 + $0x98] sm:$0xf]
        %v1489 = vld [vmem:[#allocation10 + $0x9c] sm:$0xff]
        %v1490 = vld [vmem:[#allocation10 + $0xa4] sm:$0xf]
        %v1491 = vld [vmem:[#allocation10 + $0xa8] sm:$0xff]
        %v1492 = vld [vmem:[#allocation10 + $0xb0] sm:$0xf]
        %v1493 = vld [vmem:[#allocation10 + $0xb4] sm:$0xff]
        %v1494 = vld [vmem:[#allocation10 + $0xbc] sm:$0xf]
        %v1527 = vunpack.c.l.b16 %v1463
        %v1528 = vunpack.c.h.b16 %v1463
        %v1529 = vunpack.c.l.b16 %v1464
        %v1530 = vunpack.c.l.b16 %v1465
        %v1531 = vunpack.c.h.b16 %v1465
        %v1532 = vunpack.c.l.b16 %v1466
        %v1533 = vunpack.c.l.b16 %v1467
        %v1534 = vunpack.c.h.b16 %v1467
        %v1535 = vunpack.c.l.b16 %v1468
        %v1536 = vunpack.c.l.b16 %v1469
        %v1537 = vunpack.c.h.b16 %v1469
        %v1538 = vunpack.c.l.b16 %v1470
        %v1539 = vunpack.c.l.b16 %v1471
        %v1540 = vunpack.c.h.b16 %v1471
        %v1541 = vunpack.c.l.b16 %v1472
        %v1542 = vunpack.c.l.b16 %v1473
        %v1543 = vunpack.c.h.b16 %v1473
        %v1544 = vunpack.c.l.b16 %v1474
        %v1545 = vunpack.c.l.b16 %v1475
        %v1546 = vunpack.c.h.b16 %v1475
        %v1547 = vunpack.c.l.b16 %v1476
        %v1548 = vunpack.c.l.b16 %v1477
        %v1549 = vunpack.c.h.b16 %v1477
        %v1550 = vunpack.c.l.b16 %v1478
        %v1551 = vunpack.c.l.b16 %v1479
        %v1552 = vunpack.c.h.b16 %v1479
        %v1553 = vunpack.c.l.b16 %v1480
        %v1554 = vunpack.c.l.b16 %v1481
        %v1555 = vunpack.c.h.b16 %v1481
        %v1556 = vunpack.c.l.b16 %v1482
        %v1557 = vunpack.c.l.b16 %v1483
        %v1558 = vunpack.c.h.b16 %v1483
        %v1559 = vunpack.c.l.b16 %v1484
        %v1560 = vunpack.c.l.b16 %v1485
        %v1561 = vunpack.c.h.b16 %v1485
        %v1562 = vunpack.c.l.b16 %v1486
        %v1563 = vunpack.c.l.b16 %v1487
        %v1564 = vunpack.c.h.b16 %v1487
        %v1565 = vunpack.c.l.b16 %v1488
        %v1566 = vunpack.c.l.b16 %v1489
        %v1567 = vunpack.c.h.b16 %v1489
        %v1568 = vunpack.c.l.b16 %v1490
        %v1569 = vunpack.c.l.b16 %v1491
        %v1570 = vunpack.c.h.b16 %v1491
        %v1571 = vunpack.c.l.b16 %v1492
        %v1572 = vunpack.c.l.b16 %v1493
        %v1573 = vunpack.c.h.b16 %v1493
        %v1574 = vunpack.c.l.b16 %v1494
        %v1575 = vpack.c.b16 %v1530, %v1527
        %v1576 = vpack.c.b16 %v1531, %v1528
        %v1577 = vpack.c.b16 %v1532, %v1529
        %v1578 = vpack.c.b16 %v1536, %v1533
        %v1579 = vpack.c.b16 %v1537, %v1534
        %v1580 = vpack.c.b16 %v1538, %v1535
        %v1581 = vpack.c.b16 %v1542, %v1539
        %v1582 = vpack.c.b16 %v1543, %v1540
        %v1583 = vpack.c.b16 %v1544, %v1541
        %v1584 = vpack.c.b16 %v1548, %v1545
        %v1585 = vpack.c.b16 %v1549, %v1546
        %v1586 = vpack.c.b16 %v1550, %v1547
        %v1587 = vpack.c.b16 %v1554, %v1551
        %v1588 = vpack.c.b16 %v1555, %v1552
        %v1589 = vpack.c.b16 %v1556, %v1553
        %v1590 = vpack.c.b16 %v1560, %v1557
        %v1591 = vpack.c.b16 %v1561, %v1558
        %v1592 = vpack.c.b16 %v1562, %v1559
        %v1593 = vpack.c.b16 %v1566, %v1563
        %v1594 = vpack.c.b16 %v1567, %v1564
        %v1595 = vpack.c.b16 %v1568, %v1565
        %v1596 = vpack.c.b16 %v1572, %v1569
        %v1597 = vpack.c.b16 %v1573, %v1570
        %v1598 = vpack.c.b16 %v1574, %v1571
        %1623 = vmatprep.subr.bf16.mxu0 %v1576
        %1624 = vmatpush1.bf16.msra.mxu0 %v1575
        %1625 = vmatprep.subr.bf16.mxu0 %v1579
        %1626 = vmatpush1.bf16.msra.mxu0 %v1578
        %1627 = vmatprep.subr.bf16.mxu0 %v1582
        %1628 = vmatpush1.bf16.msra.mxu0 %v1581
        %1629 = vmatprep.subr.bf16.mxu0 %v1585
        %1630 = vmatpush1.bf16.msra.mxu0 %v1584
        %1631 = vmatprep.subr.bf16.mxu0 %v1588
        %1632 = vmatpush1.bf16.msra.mxu0 %v1587
        %1633 = vmatprep.subr.bf16.mxu0 %v1591
        %1634 = vmatpush1.bf16.msra.mxu0 %v1590
        %1635 = vmatprep.subr.bf16.mxu0 %v1594
        %1636 = vmatpush1.bf16.msra.mxu0 %v1593
        %1637 = vmatprep.subr.bf16.mxu0 %v1597
        %1638 = vmatpush1.bf16.msra.mxu0 %v1596
        %1639 = vmatprep.subr.bf16.mxu0 0
        %1640 = vmatpush1.bf16.msra.mxu0 0
        %1641 = vmatprep.subr.bf16.mxu0 0
        %1642 = vmatpush1.bf16.msra.mxu0 0
        %1643 = vmatprep.subr.bf16.mxu0 0
        %1644 = vmatpush1.bf16.msra.mxu0 0
        %1645 = vmatprep.subr.bf16.mxu0 0
        %1646 = vmatpush1.bf16.msra.mxu0 0
        %1647 = vmatprep.subr.bf16.mxu0 0
        %1648 = vmatpush1.bf16.msra.mxu0 0
        %1649 = vmatprep.subr.bf16.mxu0 0
        %1650 = vmatpush1.bf16.msra.mxu0 0
        %1651 = vmatprep.subr.bf16.mxu0 0
        %1652 = vmatpush1.bf16.msra.mxu0 0
        %1653 = vmatprep.subr.bf16.mxu0 0
        %1654 = vmatpush1.bf16.msra.mxu0 0
        %1655 = vmatprep.mubr.bf16.mxu0 0
        %1656 = vmatmul.mubr.bf16.gmra.mrb[0].mxu0 %v1462
        %v1657 = vpop.f32.mrb[0].mxu0
        %v1658 = vadd.f32 0.0, %v1657
        %v1659 = vpop.f32.mrb[0].mxu0
        %v1660 = vadd.f32 0.0, %v1659
        %v1661 = vpop.f32.mrb[0].mxu0
        %v1662 = vpop.f32.mrb[0].mxu0
        %1663 = vdwg.mxu0
        %1664 = vmatprep.subr.bf16.mxu0 0
        %1665 = vmatpush1.bf16.msra.mxu0 %v1577
        %1666 = vmatprep.subr.bf16.mxu0 0
        %1667 = vmatpush1.bf16.msra.mxu0 %v1580
        %1668 = vmatprep.subr.bf16.mxu0 0
        %1669 = vmatpush1.bf16.msra.mxu0 %v1583
        %1670 = vmatprep.subr.bf16.mxu0 0
        %1671 = vmatpush1.bf16.msra.mxu0 %v1586
        %1672 = vmatprep.subr.bf16.mxu0 0
        %1673 = vmatpush1.bf16.msra.mxu0 %v1589
        %1674 = vmatprep.subr.bf16.mxu0 0
        %1675 = vmatpush1.bf16.msra.mxu0 %v1592
        %1676 = vmatprep.subr.bf16.mxu0 0
        %1677 = vmatpush1.bf16.msra.mxu0 %v1595
        %1678 = vmatprep.subr.bf16.mxu0 0
        %1679 = vmatpush1.bf16.msra.mxu0 %v1598
        %1680 = vmatprep.subr.bf16.mxu0 0
        %1681 = vmatpush1.bf16.msra.mxu0 0
        %1682 = vmatprep.subr.bf16.mxu0 0
        %1683 = vmatpush1.bf16.msra.mxu0 0
        %1684 = vmatprep.subr.bf16.mxu0 0
        %1685 = vmatpush1.bf16.msra.mxu0 0
        %1686 = vmatprep.subr.bf16.mxu0 0
        %1687 = vmatpush1.bf16.msra.mxu0 0
        %1688 = vmatprep.subr.bf16.mxu0 0
        %1689 = vmatpush1.bf16.msra.mxu0 0
        %1690 = vmatprep.subr.bf16.mxu0 0
        %1691 = vmatpush1.bf16.msra.mxu0 0
        %1692 = vmatprep.subr.bf16.mxu0 0
        %1693 = vmatpush1.bf16.msra.mxu0 0
        %1694 = vmatprep.subr.bf16.mxu0 0
        %1695 = vmatpush1.bf16.msra.mxu0 0
        %1696 = vmatprep.mubr.bf16.mxu0 0
        %1697 = vmatmul.mubr.bf16.gmra.mrb[0].mxu0 %v1462
        %v1698 = vpop.f32.mrb[0].mxu0
        %v1699 = vadd.f32 0.0, %v1698
        %v1700 = vpop.f32.mrb[0].mxu0
        %v1701 = vpop.f32.mrb[0].mxu0
        %v1702 = vpop.f32.mrb[0].mxu0
        %1703 = vdwg.mxu0
        %v1704 = vadd.f32 %v1459, %v1658
        %v1705 = vxor.u32 %v1704, 2147483648
        %v1706 = vmul.f32 %v1705, 1.442695
        %v1707 = vpow.pop %v1706
        %v1708 = vadd.f32 %v1707, 1.0
        %v1709 = vrcp.pop %v1708
        %v1710 = vmul.f32 1.0, %v1709
        %v1711 = vadd.f32 %v1460, %v1660
        %v1712 = vxor.u32 %v1711, 2147483648
        %v1713 = vmul.f32 %v1712, 1.442695
        %v1714 = vpow.pop %v1713
        %v1715 = vadd.f32 %v1714, 1.0
        %v1716 = vrcp.pop %v1715
        %v1717 = vmul.f32 1.0, %v1716
        %v1718 = vadd.f32 %v1699, %v647
        %v1719 = vmul.f32 %v1710, %v1718
        %v1720 = vadd.f32 %v1461, %v1719
        %v1721 = vtanh.pop %v1720
        %v1722 = vsub.f32 1.0, %v1717
        %v1723 = vmul.f32 %v1722, %v1721
        %v1724 = vmul.f32 %v1717, %v1455
        %v1725 = vadd.f32 %v1723, %v1724
        %s1726 = scalar_lea.vmem %s335, 24 [#allocation12]
        %1727 = vst [vmem:[%s1726] sm:$0xff] %v1725
        %1728 = vst [vmem:[#allocation2] sm:$0xff] %v1725
        %s1729 = sand.u32 %s185, 1
        %s1730 = scalar_lea.sflag [#allocation6], %s1729
        %s1731 = sand.u32 %s185, 1
        %s1732 = smul.addr %s1731, 32
        %s1733 = scalar_lea.vmem [#allocation12], %s1732
        // Predicated region
        $region65: #{tpu_custom_call.1} parent=43 // pred_check
          %p1734 = pneg %p195
        $region66: #{tpu_custom_call.1} parent=43 // pred_check_branch
          %1736 = sbr.rel (%p1734) target = $region68
        $region67: #{tpu_custom_call.1} parent=43 // pred_region
          %s1737 = smul.u32 4, %s30
          %s1739 = ssub.s32 512, 512
          %1740 = vsyncadd %s1730, %s1739
          %s1741 = sadd.s32 %s29, %s1737
          %s1742 = smul.addr %s1741, 128
          %s1743 = scalar_lea.hbm %s6, %s1742
          %s1744 = sshll.u32 %s1733, 4
          %s1745 = int_to_ptr.vmem [resolvable:$true] %s1744
          %1750 = dma.vmem_to_hbm [thread:$0]  %s1745, 512, %s1743, %s1730, 128, 128, 8
        $region68: #{tpu_custom_call.1} parent=43 // pred_fallthru
          _
      $region44: #{tpu_custom_call.1} parent=5 // pred_fallthru
        _
      %p1751 = scmp.le.s32.totalorder 2, %s20
      // Predicated region
      $region69: #{tpu_custom_call.1} parent=5 // pred_check
        %p1752 = pneg %p1751
      $region70: #{tpu_custom_call.1} parent=5 // pred_check_branch
        %1754 = sbr.rel (%p1752) target = $region72
      $region71: #{tpu_custom_call.1} parent=5 // pred_region
        %s1755 = ssub.s32 %s20, 2
        // Predicated region
        $region73: #{tpu_custom_call.1} parent=71 // pred_check
          %p1756 = pneg %p201
        $region74: #{tpu_custom_call.1} parent=71 // pred_check_branch
          %1758 = sbr.rel (%p1756) target = $region76
        $region75: #{tpu_custom_call.1} parent=71 // pred_region
          %s1759 = sand.u32 %s186, 1
          %s1760 = scalar_lea.sflag [#allocation6], %s1759
          %s1761 = sand.u32 %s186, 1
          %s1762 = smul.addr %s1761, 32
          %s1763 = scalar_lea.vmem [#allocation12], %s1762
          %1764 = dma.done %s1760, 512
        $region76: #{tpu_custom_call.1} parent=71 // pred_fallthru
          _
      $region72: #{tpu_custom_call.1} parent=5 // pred_fallthru
        _
    $region6: #{tpu_custom_call.1} parent=1 // loop_footer
      %s24 = sadd.s32 1, %s20
    $region7: #{tpu_custom_call.1} parent=1 // loop_footer_branch
      %19 = sbr.rel target = $region3
    $region8: #{tpu_custom_call.1} parent=1 // loop_exit
      _
    %1765 = vsyncpa [#allocation5], 1
    %s1766 = scalar_lea.sflag [#allocation5], 1
    %1767 = vsyncpa %s1766, 1
    %1768 = vsyncpa [#allocation8], 1
    %1769 = vsyncpa [#allocation11], 1
    %1770 = vsyncpa [#allocation6], 1
    %s1771 = scalar_lea.sflag [#allocation6], 1
    %1772 = vsyncpa %s1771, 1

</llo_original>
